<compile_context>
chip_gen: v7x
topology: tpu7x:2x2x1
jax: 0.10.0
libtpu: 0.0.40
codegen_flags: <defaults>
</compile_context>

<pallas_src>
import jax
import jax.numpy as jnp
import numpy as np
from jax.experimental import pallas as pl
from jax.experimental.pallas import tpu as pltpu

# ----------------------------- model config ---------------------------------
BATCH = 2
IN_CHANS = 3
IMG = 16
PATCH = 4
N_TOKENS = (IMG // PATCH) ** 2          # 16
EMBED = 32
HEADS = 4
HEAD_DIM = EMBED // HEADS               # 8
DEPTH = 2
MLP_HIDDEN = 2 * EMBED                  # 64
NUM_CLASSES = 10
LANES = 128                             # lane-dense padded width
LN_EPS_BLOCK = 1e-6                     # ViT block LayerNorm eps
LN_EPS_FINAL = 1e-5                     # nn.LayerNorm default eps

ROWS = BATCH * N_TOKENS                 # 32  (batch*seq folded into one axis)
HR = HEADS * ROWS                       # 128 (head-stacked attention rows)
CPP = IN_CHANS * PATCH * PATCH          # 48


# ------------------ packed weight slab layout (bf16, (W_ROWS, 128)) ----------
def _make_w_layout():
    entries = [("pe", CPP)]
    for d in range(DEPTH):
        entries += [(f"qkv{d}", EMBED), (f"proj{d}", EMBED),
                    (f"fc1{d}", EMBED), (f"fc2{d}", LANES)]   # fc2 K padded 64->128
    entries.append(("head", EMBED))
    off, layout = 0, {}
    for name, k in entries:
        layout[name] = off          # every K is a multiple of 16 -> bf16 tile aligned
        off += k
    return layout, off


W_OFF, W_ROWS = _make_w_layout()

# ------------- packed aux slab layout (f32, (A_ROWS, 128)) -------------------
# rows 0..19 : bias / LayerNorm vectors (1 row each)
A_PE_B = 0
A_BLK0 = 1                   # per block: ln1_g, ln1_b, b_qkv, proj_b, ln2_g, ln2_b, fc1_b, fc2_b
A_LN_G = A_BLK0 + 8 * DEPTH  # final LayerNorm gamma
A_LN_B = A_LN_G + 1
A_FC_B = A_LN_G + 2
A_QMASK = ((A_FC_B + 1) + 7) // 8 * 8   # 24 : (HR, E)   head lane-select mask
A_AMASK = A_QMASK + HR                  # 152: (HR, R)   additive same-image mask
A_POOL = A_AMASK + HR                   # 280: (B, R)    mean-pool matrix
A_ROWS = A_POOL + 8                     # 288 (assumes BATCH <= 8)


# ----------------------------- kernel helpers --------------------------------
def _layernorm(x, g, b, eps):
    mu = jnp.mean(x, axis=-1, keepdims=True)
    var = jnp.mean(jnp.square(x - mu), axis=-1, keepdims=True)
    return (x - mu) * jax.lax.rsqrt(var + eps) * g + b


def _gelu_exact(y):
    # exact (erf) GELU, matching torch.nn.GELU default
    return 0.5 * y * (1.0 + jax.lax.erf(y * 0.7071067811865476))


def _mm(a, w):
    # bf16 x bf16 MXU matmul with f32 accumulation
    return jnp.dot(a.astype(w.dtype), w, preferred_element_type=jnp.float32)


# ----------------------------- fused kernel ----------------------------------
def _fused_vit_kernel(xp_ref, w_ref, aux_ref, o_ref):
    f32 = jnp.float32
    E, R = EMBED, ROWS

    def wmat(name, k, n):
        off = W_OFF[name]                       # static, 16-row-aligned
        return w_ref[off:off + k, :n]           # bf16 (k, n)

    vecs = aux_ref[0:A_QMASK, :]                # (24, 128) bias/LN bank, loaded once

    def vec(row, n=E):
        return vecs[row:row + 1, :n]            # (1, n)

    qmask = aux_ref[A_QMASK:A_QMASK + HR, :E]        # (128, 32) head lane masks
    amask = aux_ref[A_AMASK:A_AMASK + HR, :R]        # (128, 32) additive 0/-1e30
    pool = aux_ref[A_POOL:A_POOL + 8, :R][:BATCH, :]  # (B, 32) mean-pool matrix

    # ---- patch embedding (conv pxp stride p == matmul + bias); pos_drop = id
    x = _mm(xp_ref[...], wmat("pe", CPP, E)) + vec(A_PE_B)           # (R, E) f32

    # TODO(synk): if DEPTH is scaled up, replace this static unroll by a weight
    # slab indexed with pl.ds inside lax.fori_loop to bound vreg live ranges.
    for d in range(DEPTH):
        base = A_BLK0 + 8 * d

        # ---------------- multi-head self-attention ------------------------
        h = _layernorm(x, vec(base + 0), vec(base + 1), LN_EPS_BLOCK)
        # fused qkv, lane-dense (R,128); q columns pre-scaled by head_dim**-0.5
        qkv = _mm(h, wmat(f"qkv{d}", E, LANES)) + vec(base + 2, LANES)
        q = qkv[:, 0:E]
        k = qkv[:, E:2 * E]
        v = qkv[:, 2 * E:3 * E]

        # stack the HEADS heads along the sublane axis: one score matmul,
        # one masked softmax, one P@V for all heads.
        q_st = jnp.concatenate([q] * HEADS, axis=0) * qmask          # (HR, E)
        s = jnp.einsum("qd,kd->qk", q_st, k,
                       preferred_element_type=f32) + amask           # (HR, R)
        s = s - jnp.max(s, axis=-1, keepdims=True)
        p = jnp.exp(s)
        p = p * pl.reciprocal(jnp.sum(p, axis=-1, keepdims=True), approx=True)
        o_st = jnp.dot(p, v, preferred_element_type=f32)             # (HR, E)

        # recombine heads: 4 sublane-aligned (rows at multiples of 32) masked adds
        attn = o_st[0:R, :] * qmask[0:1, :]
        for hh in range(1, HEADS):
            attn = attn + o_st[hh * R:(hh + 1) * R, :] * qmask[hh * R:hh * R + 1, :]

        x = x + _mm(attn, wmat(f"proj{d}", E, E)) + vec(base + 3)

        # ---------------- MLP (hidden lane-padded 64 -> 128) ----------------
        h = _layernorm(x, vec(base + 4), vec(base + 5), LN_EPS_BLOCK)
        h = _gelu_exact(_mm(h, wmat(f"fc1{d}", E, LANES)) + vec(base + 6, LANES))
        x = x + _mm(h, wmat(f"fc2{d}", LANES, E)) + vec(base + 7)

    # ---- Reduce('b n e -> b e', mean) as pooling matmul, final LN, classifier
    pooled = jnp.dot(pool, x, preferred_element_type=f32)            # (B, E)
    pooled = _layernorm(pooled, vec(A_LN_G), vec(A_LN_B), LN_EPS_FINAL)
    logits = _mm(pooled, wmat("head", E, LANES)) + vec(A_FC_B, LANES)  # (B, 128)
    o_ref[...] = logits.astype(o_ref.dtype)


# ----------------------------- parameters ------------------------------------
def init_params(key):
    def nrm(k, shape, scale=0.02):
        return scale * jax.random.normal(k, shape, dtype=jnp.float32)

    keys = jax.random.split(key, 2 + DEPTH)
    params = {
        # Conv2d(C, E, p, p, stride=p) weight flattened in (C, p, p) order —
        # must be enforced when importing real torch Conv2d weights.
        "pe_w": nrm(keys[0], (CPP, EMBED)),
        "pe_b": jnp.zeros((EMBED,), jnp.float32),
        "ln_g": jnp.ones((EMBED,), jnp.float32),
        "ln_b": jnp.zeros((EMBED,), jnp.float32),
        "fc_w": nrm(keys[1], (EMBED, NUM_CLASSES)),
        "fc_b": jnp.zeros((NUM_CLASSES,), jnp.float32),
        "blocks": [],
    }
    for d in range(DEPTH):
        bk = jax.random.split(keys[2 + d], 4)
        params["blocks"].append({
            "ln1_g": jnp.ones((EMBED,), jnp.float32),
            "ln1_b": jnp.zeros((EMBED,), jnp.float32),
            "qkv_w": nrm(bk[0], (EMBED, 3 * EMBED)),     # fused q|k|v Linear
            "qkv_b": jnp.zeros((3 * EMBED,), jnp.float32),
            "proj_w": nrm(bk[1], (EMBED, EMBED)),
            "proj_b": jnp.zeros((EMBED,), jnp.float32),
            "ln2_g": jnp.ones((EMBED,), jnp.float32),
            "ln2_b": jnp.zeros((EMBED,), jnp.float32),
            "fc1_w": nrm(bk[2], (EMBED, MLP_HIDDEN)),
            "fc1_b": jnp.zeros((MLP_HIDDEN,), jnp.float32),
            "fc2_w": nrm(bk[3], (MLP_HIDDEN, EMBED)),
            "fc2_b": jnp.zeros((EMBED,), jnp.float32),
        })
    return params


def pack_params(params):
    """Pack all weights/biases/masks into two contiguous slabs (one DMA each)."""
    scale = HEAD_DIM ** -0.5

    def put_mat(slab, name, mat):
        off = W_OFF[name]
        k, n = mat.shape
        return slab.at[off:off + k, :n].set(mat)

    w = jnp.zeros((W_ROWS, LANES), jnp.float32)
    w = put_mat(w, "pe", params["pe_w"])
    for d, blk in enumerate(params["blocks"]):
        qkv_w = blk["qkv_w"].at[:, :EMBED].multiply(scale)   # fold attn scale into W_q
        w = put_mat(w, f"qkv{d}", qkv_w)
        w = put_mat(w, f"proj{d}", blk["proj_w"])
        w = put_mat(w, f"fc1{d}", blk["fc1_w"])
        w = put_mat(w, f"fc2{d}", blk["fc2_w"])              # rows 64:128 stay zero
    w = put_mat(w, "head", params["fc_w"])                   # cols 10:128 stay zero

    def put_vec(slab, row, v):
        return slab.at[row, :v.shape[0]].set(v)

    a = jnp.zeros((A_ROWS, LANES), jnp.float32)
    a = put_vec(a, A_PE_B, params["pe_b"])
    for d, blk in enumerate(params["blocks"]):
        base = A_BLK0 + 8 * d
        qkv_b = blk["qkv_b"].at[:EMBED].multiply(scale)      # fold attn scale into b_q
        a = put_vec(a, base + 0, blk["ln1_g"])
        a = put_vec(a, base + 1, blk["ln1_b"])
        a = put_vec(a, base + 2, qkv_b)
        a = put_vec(a, base + 3, blk["proj_b"])
        a = put_vec(a, base + 4, blk["ln2_g"])
        a = put_vec(a, base + 5, blk["ln2_b"])
        a = put_vec(a, base + 6, blk["fc1_b"])
        a = put_vec(a, base + 7, blk["fc2_b"])
    a = put_vec(a, A_LN_G, params["ln_g"])
    a = put_vec(a, A_LN_B, params["ln_b"])
    a = put_vec(a, A_FC_B, params["fc_b"])

    # Attention / pooling masks precomputed on the host (numpy), packed with params.
    lane_head = np.arange(EMBED) // HEAD_DIM
    row_head = np.repeat(np.arange(HEADS), ROWS)
    qmask = (row_head[:, None] == lane_head[None, :]).astype(np.float32)      # (HR, E)
    img_of_tok = np.arange(ROWS) // N_TOKENS
    img_of_row = np.tile(img_of_tok, HEADS)
    amask = np.where(img_of_row[:, None] == img_of_tok[None, :],
                     0.0, -1e30).astype(np.float32)                           # (HR, R)
    pool = (np.arange(BATCH)[:, None] == img_of_tok[None, :]).astype(np.float32) / N_TOKENS
    a = a.at[A_QMASK:A_QMASK + HR, :EMBED].set(jnp.asarray(qmask))
    a = a.at[A_AMASK:A_AMASK + HR, :ROWS].set(jnp.asarray(amask))
    a = a.at[A_POOL:A_POOL + BATCH, :ROWS].set(jnp.asarray(pool))

    return {"w_slab": w.astype(jnp.bfloat16), "aux": a}


# ----------------------------- forward ----------------------------------------
def base_vit_forward(img, packed):
    B, C, H, W = img.shape
    assert (B, C, H, W) == (BATCH, IN_CHANS, IMG, IMG)
    p = PATCH
    n = (H // p) * (W // p)
    # non-overlapping patch extraction; features flattened in (C, p, p) order to
    # match the flattened conv weight packed into the weight slab.
    xp = (img.reshape(B, C, H // p, p, W // p, p)
             .transpose(0, 2, 4, 1, 3, 5)
             .reshape(B * n, C * p * p))

    # Single grid-free launch: 3 input DMAs (patches + 2 packed slabs), whole
    # arrays VMEM-resident, no double-buffering.  <1 MiB total -> fits VMEM on
    # v5e/v6e/v7x.
    # TODO(synk): when B*N is scaled up (or on v7x's 2 TCs), add a row-tile grid
    # axis marked "parallel" and re-derive tiling against the 64 MiB VMEM budget.
    out = pl.pallas_call(
        _fused_vit_kernel,
        out_shape=jax.ShapeDtypeStruct((B, LANES), jnp.float32),
        in_specs=[pl.BlockSpec(memory_space=pltpu.MemorySpace.VMEM)] * 3,
        out_specs=pl.BlockSpec(memory_space=pltpu.MemorySpace.VMEM),
    )(xp, packed["w_slab"], packed["aux"])
    return out[:, :NUM_CLASSES]


# ----------------------------- main -------------------------------------------
if __name__ == "__main__":
    key = jax.random.PRNGKey(0)
    k_img, k_par = jax.random.split(key)
    img = jax.random.normal(k_img, (BATCH, IN_CHANS, IMG, IMG), dtype=jnp.float32)
    params = init_params(k_par)
    packed = pack_params(params)

    fwd = jax.jit(base_vit_forward)
    out = fwd(img, packed)
    jax.block_until_ready(out)
    assert out.shape == (BATCH, NUM_CLASSES), out.shape
    print("KERNEL_OK")
</pallas_src>

<mosaic_0001>
module attributes {stable_mosaic.version = 11 : i64} {
  func.func @_fused_vit_kernel(%arg0: memref<32x48xf32, #tpu.memory_space<vmem>>, %arg1: memref<528x128xbf16, #tpu.memory_space<vmem>>, %arg2: memref<288x128xf32, #tpu.memory_space<vmem>>, %arg3: memref<2x128xf32, #tpu.memory_space<vmem>>) attributes {dimension_semantics = [], scalar_prefetch = 0 : i64, scratch_operands = 0 : i64, tpu.core_type = #tpu.core_type<tc>} {
    %c0 = arith.constant 0 : index
    %c0_0 = arith.constant 0 : index
    %0 = vector.load %arg2[%c0, %c0_0] : memref<288x128xf32, #tpu.memory_space<vmem>>, vector<24x128xf32>
    %c24 = arith.constant 24 : index
    %c0_1 = arith.constant 0 : index
    %1 = vector.load %arg2[%c24, %c0_1] : memref<288x128xf32, #tpu.memory_space<vmem>>, vector<128x32xf32>
    %c152 = arith.constant 152 : index
    %c0_2 = arith.constant 0 : index
    %2 = vector.load %arg2[%c152, %c0_2] : memref<288x128xf32, #tpu.memory_space<vmem>>, vector<128x32xf32>
    %c280 = arith.constant 280 : index
    %c0_3 = arith.constant 0 : index
    %3 = vector.load %arg2[%c280, %c0_3] : memref<288x128xf32, #tpu.memory_space<vmem>>, vector<8x32xf32>
    %4 = vector.extract_strided_slice %3 {offsets = [0, 0], sizes = [2, 32], strides = [1, 1]} : vector<8x32xf32> to vector<2x32xf32>
    %c0_4 = arith.constant 0 : index
    %c0_5 = arith.constant 0 : index
    %5 = vector.load %arg0[%c0_4, %c0_5] : memref<32x48xf32, #tpu.memory_space<vmem>>, vector<32x48xf32>
    %c0_6 = arith.constant 0 : index
    %c0_7 = arith.constant 0 : index
    %6 = vector.load %arg1[%c0_6, %c0_7] : memref<528x128xbf16, #tpu.memory_space<vmem>>, vector<48x32xbf16>
    %7 = arith.truncf %5 : vector<32x48xf32> to vector<32x48xbf16>
    %cst = arith.constant dense<0.000000e+00> : vector<32x32xf32>
    %8 = tpu.matmul %7, %6, %cst {dimension_numbers = #tpu.dot_dimension_numbers<[1], [0], [0], [1], [0, 0, 1, 1], [], []>} : vector<32x48xbf16>, vector<48x32xbf16>, vector<32x32xf32> -> vector<32x32xf32>
    %9 = vector.extract_strided_slice %0 {offsets = [0, 0], sizes = [1, 32], strides = [1, 1]} : vector<24x128xf32> to vector<1x32xf32>
    %10 = vector.broadcast %9 : vector<1x32xf32> to vector<32x32xf32>
    %11 = arith.addf %8, %10 : vector<32x32xf32>
    %12 = vector.extract_strided_slice %0 {offsets = [1, 0], sizes = [1, 32], strides = [1, 1]} : vector<24x128xf32> to vector<1x32xf32>
    %13 = vector.extract_strided_slice %0 {offsets = [2, 0], sizes = [1, 32], strides = [1, 1]} : vector<24x128xf32> to vector<1x32xf32>
    %cst_8 = arith.constant dense<0.000000e+00> : vector<32xf32>
    %14 = vector.multi_reduction <add>, %11, %cst_8 [1] : vector<32x32xf32> to vector<32xf32>
    %15 = vector.shape_cast %14 : vector<32xf32> to vector<32x1xf32>
    %cst_9 = arith.constant 3.200000e+01 : f32
    %16 = vector.broadcast %cst_9 : f32 to vector<32x1xf32>
    %17 = arith.divf %15, %16 : vector<32x1xf32>
    %18 = vector.broadcast %17 : vector<32x1xf32> to vector<32x32xf32>
    %19 = arith.subf %11, %18 : vector<32x32xf32>
    %20 = arith.mulf %19, %19 : vector<32x32xf32>
    %cst_10 = arith.constant dense<0.000000e+00> : vector<32xf32>
    %21 = vector.multi_reduction <add>, %20, %cst_10 [1] : vector<32x32xf32> to vector<32xf32>
    %22 = vector.shape_cast %21 : vector<32xf32> to vector<32x1xf32>
    %cst_11 = arith.constant 3.200000e+01 : f32
    %23 = vector.broadcast %cst_11 : f32 to vector<32x1xf32>
    %24 = arith.divf %22, %23 : vector<32x1xf32>
    %25 = vector.broadcast %17 : vector<32x1xf32> to vector<32x32xf32>
    %26 = arith.subf %11, %25 : vector<32x32xf32>
    %cst_12 = arith.constant 9.99999997E-7 : f32
    %27 = vector.broadcast %cst_12 : f32 to vector<32x1xf32>
    %28 = arith.addf %24, %27 : vector<32x1xf32>
    %29 = math.rsqrt %28 : vector<32x1xf32>
    %30 = vector.broadcast %29 : vector<32x1xf32> to vector<32x32xf32>
    %31 = arith.mulf %26, %30 : vector<32x32xf32>
    %32 = vector.broadcast %12 : vector<1x32xf32> to vector<32x32xf32>
    %33 = arith.mulf %31, %32 : vector<32x32xf32>
    %34 = vector.broadcast %13 : vector<1x32xf32> to vector<32x32xf32>
    %35 = arith.addf %33, %34 : vector<32x32xf32>
    %c48 = arith.constant 48 : index
    %c0_13 = arith.constant 0 : index
    %36 = vector.load %arg1[%c48, %c0_13] : memref<528x128xbf16, #tpu.memory_space<vmem>>, vector<32x128xbf16>
    %37 = arith.truncf %35 : vector<32x32xf32> to vector<32x32xbf16>
    %cst_14 = arith.constant dense<0.000000e+00> : vector<32x128xf32>
    %38 = tpu.matmul %37, %36, %cst_14 {dimension_numbers = #tpu.dot_dimension_numbers<[1], [0], [0], [1], [0, 0, 1, 1], [], []>} : vector<32x32xbf16>, vector<32x128xbf16>, vector<32x128xf32> -> vector<32x128xf32>
    %39 = vector.extract_strided_slice %0 {offsets = [3, 0], sizes = [1, 128], strides = [1, 1]} : vector<24x128xf32> to vector<1x128xf32>
    %40 = vector.broadcast %39 : vector<1x128xf32> to vector<32x128xf32>
    %41 = arith.addf %38, %40 : vector<32x128xf32>
    %42 = vector.extract_strided_slice %41 {offsets = [0, 0], sizes = [32, 32], strides = [1, 1]} : vector<32x128xf32> to vector<32x32xf32>
    %43 = vector.extract_strided_slice %41 {offsets = [0, 32], sizes = [32, 32], strides = [1, 1]} : vector<32x128xf32> to vector<32x32xf32>
    %44 = vector.extract_strided_slice %41 {offsets = [0, 64], sizes = [32, 32], strides = [1, 1]} : vector<32x128xf32> to vector<32x32xf32>
    %45 = tpu.concatenate %42, %42, %42, %42 in 0 : vector<32x32xf32>, vector<32x32xf32>, vector<32x32xf32>, vector<32x32xf32> -> vector<128x32xf32>
    %46 = arith.mulf %45, %1 : vector<128x32xf32>
    "tpu.trace_start"() <{level = 10 : i32, message = "qd,kd->qk"}> : () -> ()
    %cst_15 = arith.constant dense<0.000000e+00> : vector<128x32xf32>
    %47 = tpu.matmul %46, %43, %cst_15 {dimension_numbers = #tpu.dot_dimension_numbers<[1], [1], [0], [0], [0, 0, 1, 0], [], []>} : vector<128x32xf32>, vector<32x32xf32>, vector<128x32xf32> -> vector<128x32xf32>
    "tpu.trace_stop"() : () -> ()
    %48 = arith.addf %47, %2 : vector<128x32xf32>
    %cst_16 = arith.constant dense<0xFF800000> : vector<128xf32>
    %49 = vector.multi_reduction <maximumf>, %48, %cst_16 [1] : vector<128x32xf32> to vector<128xf32>
    %50 = vector.shape_cast %49 : vector<128xf32> to vector<128x1xf32>
    %51 = vector.broadcast %50 : vector<128x1xf32> to vector<128x32xf32>
    %52 = arith.subf %48, %51 : vector<128x32xf32>
    %53 = math.exp %52 : vector<128x32xf32>
    %cst_17 = arith.constant dense<0.000000e+00> : vector<128xf32>
    %54 = vector.multi_reduction <add>, %53, %cst_17 [1] : vector<128x32xf32> to vector<128xf32>
    %55 = vector.shape_cast %54 : vector<128xf32> to vector<128x1xf32>
    %56 = tpu.reciprocal %55 {approx = true} : vector<128x1xf32> -> vector<128x1xf32>
    %57 = vector.broadcast %56 : vector<128x1xf32> to vector<128x32xf32>
    %58 = arith.mulf %53, %57 : vector<128x32xf32>
    %cst_18 = arith.constant dense<0.000000e+00> : vector<128x32xf32>
    %59 = tpu.matmul %58, %44, %cst_18 {dimension_numbers = #tpu.dot_dimension_numbers<[1], [0], [0], [1], [0, 0, 1, 1], [], []>} : vector<128x32xf32>, vector<32x32xf32>, vector<128x32xf32> -> vector<128x32xf32>
    %60 = vector.extract_strided_slice %59 {offsets = [0, 0], sizes = [32, 32], strides = [1, 1]} : vector<128x32xf32> to vector<32x32xf32>
    %61 = vector.extract_strided_slice %1 {offsets = [0, 0], sizes = [1, 32], strides = [1, 1]} : vector<128x32xf32> to vector<1x32xf32>
    %62 = vector.broadcast %61 : vector<1x32xf32> to vector<32x32xf32>
    %63 = arith.mulf %60, %62 : vector<32x32xf32>
    %64 = vector.extract_strided_slice %59 {offsets = [32, 0], sizes = [32, 32], strides = [1, 1]} : vector<128x32xf32> to vector<32x32xf32>
    %65 = vector.extract_strided_slice %1 {offsets = [32, 0], sizes = [1, 32], strides = [1, 1]} : vector<128x32xf32> to vector<1x32xf32>
    %66 = vector.broadcast %65 : vector<1x32xf32> to vector<32x32xf32>
    %67 = arith.mulf %64, %66 : vector<32x32xf32>
    %68 = arith.addf %63, %67 : vector<32x32xf32>
    %69 = vector.extract_strided_slice %59 {offsets = [64, 0], sizes = [32, 32], strides = [1, 1]} : vector<128x32xf32> to vector<32x32xf32>
    %70 = vector.extract_strided_slice %1 {offsets = [64, 0], sizes = [1, 32], strides = [1, 1]} : vector<128x32xf32> to vector<1x32xf32>
    %71 = vector.broadcast %70 : vector<1x32xf32> to vector<32x32xf32>
    %72 = arith.mulf %69, %71 : vector<32x32xf32>
    %73 = arith.addf %68, %72 : vector<32x32xf32>
    %74 = vector.extract_strided_slice %59 {offsets = [96, 0], sizes = [32, 32], strides = [1, 1]} : vector<128x32xf32> to vector<32x32xf32>
    %75 = vector.extract_strided_slice %1 {offsets = [96, 0], sizes = [1, 32], strides = [1, 1]} : vector<128x32xf32> to vector<1x32xf32>
    %76 = vector.broadcast %75 : vector<1x32xf32> to vector<32x32xf32>
    %77 = arith.mulf %74, %76 : vector<32x32xf32>
    %78 = arith.addf %73, %77 : vector<32x32xf32>
    %c80 = arith.constant 80 : index
    %c0_19 = arith.constant 0 : index
    %79 = vector.load %arg1[%c80, %c0_19] : memref<528x128xbf16, #tpu.memory_space<vmem>>, vector<32x32xbf16>
    %80 = arith.truncf %78 : vector<32x32xf32> to vector<32x32xbf16>
    %cst_20 = arith.constant dense<0.000000e+00> : vector<32x32xf32>
    %81 = tpu.matmul %80, %79, %cst_20 {dimension_numbers = #tpu.dot_dimension_numbers<[1], [0], [0], [1], [0, 0, 1, 1], [], []>} : vector<32x32xbf16>, vector<32x32xbf16>, vector<32x32xf32> -> vector<32x32xf32>
    %82 = arith.addf %11, %81 : vector<32x32xf32>
    %83 = vector.extract_strided_slice %0 {offsets = [4, 0], sizes = [1, 32], strides = [1, 1]} : vector<24x128xf32> to vector<1x32xf32>
    %84 = vector.broadcast %83 : vector<1x32xf32> to vector<32x32xf32>
    %85 = arith.addf %82, %84 : vector<32x32xf32>
    %86 = vector.extract_strided_slice %0 {offsets = [5, 0], sizes = [1, 32], strides = [1, 1]} : vector<24x128xf32> to vector<1x32xf32>
    %87 = vector.extract_strided_slice %0 {offsets = [6, 0], sizes = [1, 32], strides = [1, 1]} : vector<24x128xf32> to vector<1x32xf32>
    %cst_21 = arith.constant dense<0.000000e+00> : vector<32xf32>
    %88 = vector.multi_reduction <add>, %85, %cst_21 [1] : vector<32x32xf32> to vector<32xf32>
    %89 = vector.shape_cast %88 : vector<32xf32> to vector<32x1xf32>
    %cst_22 = arith.constant 3.200000e+01 : f32
    %90 = vector.broadcast %cst_22 : f32 to vector<32x1xf32>
    %91 = arith.divf %89, %90 : vector<32x1xf32>
    %92 = vector.broadcast %91 : vector<32x1xf32> to vector<32x32xf32>
    %93 = arith.subf %85, %92 : vector<32x32xf32>
    %94 = arith.mulf %93, %93 : vector<32x32xf32>
    %cst_23 = arith.constant dense<0.000000e+00> : vector<32xf32>
    %95 = vector.multi_reduction <add>, %94, %cst_23 [1] : vector<32x32xf32> to vector<32xf32>
    %96 = vector.shape_cast %95 : vector<32xf32> to vector<32x1xf32>
    %cst_24 = arith.constant 3.200000e+01 : f32
    %97 = vector.broadcast %cst_24 : f32 to vector<32x1xf32>
    %98 = arith.divf %96, %97 : vector<32x1xf32>
    %99 = vector.broadcast %91 : vector<32x1xf32> to vector<32x32xf32>
    %100 = arith.subf %85, %99 : vector<32x32xf32>
    %cst_25 = arith.constant 9.99999997E-7 : f32
    %101 = vector.broadcast %cst_25 : f32 to vector<32x1xf32>
    %102 = arith.addf %98, %101 : vector<32x1xf32>
    %103 = math.rsqrt %102 : vector<32x1xf32>
    %104 = vector.broadcast %103 : vector<32x1xf32> to vector<32x32xf32>
    %105 = arith.mulf %100, %104 : vector<32x32xf32>
    %106 = vector.broadcast %86 : vector<1x32xf32> to vector<32x32xf32>
    %107 = arith.mulf %105, %106 : vector<32x32xf32>
    %108 = vector.broadcast %87 : vector<1x32xf32> to vector<32x32xf32>
    %109 = arith.addf %107, %108 : vector<32x32xf32>
    %c112 = arith.constant 112 : index
    %c0_26 = arith.constant 0 : index
    %110 = vector.load %arg1[%c112, %c0_26] : memref<528x128xbf16, #tpu.memory_space<vmem>>, vector<32x128xbf16>
    %111 = arith.truncf %109 : vector<32x32xf32> to vector<32x32xbf16>
    %cst_27 = arith.constant dense<0.000000e+00> : vector<32x128xf32>
    %112 = tpu.matmul %111, %110, %cst_27 {dimension_numbers = #tpu.dot_dimension_numbers<[1], [0], [0], [1], [0, 0, 1, 1], [], []>} : vector<32x32xbf16>, vector<32x128xbf16>, vector<32x128xf32> -> vector<32x128xf32>
    %113 = vector.extract_strided_slice %0 {offsets = [7, 0], sizes = [1, 128], strides = [1, 1]} : vector<24x128xf32> to vector<1x128xf32>
    %114 = vector.broadcast %113 : vector<1x128xf32> to vector<32x128xf32>
    %115 = arith.addf %112, %114 : vector<32x128xf32>
    %cst_28 = arith.constant 5.000000e-01 : f32
    %116 = vector.broadcast %cst_28 : f32 to vector<32x128xf32>
    %117 = arith.mulf %116, %115 : vector<32x128xf32>
    %cst_29 = arith.constant 0.707106769 : f32
    %118 = vector.broadcast %cst_29 : f32 to vector<32x128xf32>
    %119 = arith.mulf %115, %118 : vector<32x128xf32>
    %120 = math.erf %119 : vector<32x128xf32>
    %cst_30 = arith.constant 1.000000e+00 : f32
    %121 = vector.broadcast %cst_30 : f32 to vector<32x128xf32>
    %122 = arith.addf %121, %120 : vector<32x128xf32>
    %123 = arith.mulf %117, %122 : vector<32x128xf32>
    %c144 = arith.constant 144 : index
    %c0_31 = arith.constant 0 : index
    %124 = vector.load %arg1[%c144, %c0_31] : memref<528x128xbf16, #tpu.memory_space<vmem>>, vector<128x32xbf16>
    %125 = arith.truncf %123 : vector<32x128xf32> to vector<32x128xbf16>
    %cst_32 = arith.constant dense<0.000000e+00> : vector<32x32xf32>
    %126 = tpu.matmul %125, %124, %cst_32 {dimension_numbers = #tpu.dot_dimension_numbers<[1], [0], [0], [1], [0, 0, 1, 1], [], []>} : vector<32x128xbf16>, vector<128x32xbf16>, vector<32x32xf32> -> vector<32x32xf32>
    %127 = arith.addf %85, %126 : vector<32x32xf32>
    %128 = vector.extract_strided_slice %0 {offsets = [8, 0], sizes = [1, 32], strides = [1, 1]} : vector<24x128xf32> to vector<1x32xf32>
    %129 = vector.broadcast %128 : vector<1x32xf32> to vector<32x32xf32>
    %130 = arith.addf %127, %129 : vector<32x32xf32>
    %131 = vector.extract_strided_slice %0 {offsets = [9, 0], sizes = [1, 32], strides = [1, 1]} : vector<24x128xf32> to vector<1x32xf32>
    %132 = vector.extract_strided_slice %0 {offsets = [10, 0], sizes = [1, 32], strides = [1, 1]} : vector<24x128xf32> to vector<1x32xf32>
    %cst_33 = arith.constant dense<0.000000e+00> : vector<32xf32>
    %133 = vector.multi_reduction <add>, %130, %cst_33 [1] : vector<32x32xf32> to vector<32xf32>
    %134 = vector.shape_cast %133 : vector<32xf32> to vector<32x1xf32>
    %cst_34 = arith.constant 3.200000e+01 : f32
    %135 = vector.broadcast %cst_34 : f32 to vector<32x1xf32>
    %136 = arith.divf %134, %135 : vector<32x1xf32>
    %137 = vector.broadcast %136 : vector<32x1xf32> to vector<32x32xf32>
    %138 = arith.subf %130, %137 : vector<32x32xf32>
    %139 = arith.mulf %138, %138 : vector<32x32xf32>
    %cst_35 = arith.constant dense<0.000000e+00> : vector<32xf32>
    %140 = vector.multi_reduction <add>, %139, %cst_35 [1] : vector<32x32xf32> to vector<32xf32>
    %141 = vector.shape_cast %140 : vector<32xf32> to vector<32x1xf32>
    %cst_36 = arith.constant 3.200000e+01 : f32
    %142 = vector.broadcast %cst_36 : f32 to vector<32x1xf32>
    %143 = arith.divf %141, %142 : vector<32x1xf32>
    %144 = vector.broadcast %136 : vector<32x1xf32> to vector<32x32xf32>
    %145 = arith.subf %130, %144 : vector<32x32xf32>
    %cst_37 = arith.constant 9.99999997E-7 : f32
    %146 = vector.broadcast %cst_37 : f32 to vector<32x1xf32>
    %147 = arith.addf %143, %146 : vector<32x1xf32>
    %148 = math.rsqrt %147 : vector<32x1xf32>
    %149 = vector.broadcast %148 : vector<32x1xf32> to vector<32x32xf32>
    %150 = arith.mulf %145, %149 : vector<32x32xf32>
    %151 = vector.broadcast %131 : vector<1x32xf32> to vector<32x32xf32>
    %152 = arith.mulf %150, %151 : vector<32x32xf32>
    %153 = vector.broadcast %132 : vector<1x32xf32> to vector<32x32xf32>
    %154 = arith.addf %152, %153 : vector<32x32xf32>
    %c272 = arith.constant 272 : index
    %c0_38 = arith.constant 0 : index
    %155 = vector.load %arg1[%c272, %c0_38] : memref<528x128xbf16, #tpu.memory_space<vmem>>, vector<32x128xbf16>
    %156 = arith.truncf %154 : vector<32x32xf32> to vector<32x32xbf16>
    %cst_39 = arith.constant dense<0.000000e+00> : vector<32x128xf32>
    %157 = tpu.matmul %156, %155, %cst_39 {dimension_numbers = #tpu.dot_dimension_numbers<[1], [0], [0], [1], [0, 0, 1, 1], [], []>} : vector<32x32xbf16>, vector<32x128xbf16>, vector<32x128xf32> -> vector<32x128xf32>
    %158 = vector.extract_strided_slice %0 {offsets = [11, 0], sizes = [1, 128], strides = [1, 1]} : vector<24x128xf32> to vector<1x128xf32>
    %159 = vector.broadcast %158 : vector<1x128xf32> to vector<32x128xf32>
    %160 = arith.addf %157, %159 : vector<32x128xf32>
    %161 = vector.extract_strided_slice %160 {offsets = [0, 0], sizes = [32, 32], strides = [1, 1]} : vector<32x128xf32> to vector<32x32xf32>
    %162 = vector.extract_strided_slice %160 {offsets = [0, 32], sizes = [32, 32], strides = [1, 1]} : vector<32x128xf32> to vector<32x32xf32>
    %163 = vector.extract_strided_slice %160 {offsets = [0, 64], sizes = [32, 32], strides = [1, 1]} : vector<32x128xf32> to vector<32x32xf32>
    %164 = tpu.concatenate %161, %161, %161, %161 in 0 : vector<32x32xf32>, vector<32x32xf32>, vector<32x32xf32>, vector<32x32xf32> -> vector<128x32xf32>
    %165 = arith.mulf %164, %1 : vector<128x32xf32>
    "tpu.trace_start"() <{level = 10 : i32, message = "qd,kd->qk"}> : () -> ()
    %cst_40 = arith.constant dense<0.000000e+00> : vector<128x32xf32>
    %166 = tpu.matmul %165, %162, %cst_40 {dimension_numbers = #tpu.dot_dimension_numbers<[1], [1], [0], [0], [0, 0, 1, 0], [], []>} : vector<128x32xf32>, vector<32x32xf32>, vector<128x32xf32> -> vector<128x32xf32>
    "tpu.trace_stop"() : () -> ()
    %167 = arith.addf %166, %2 : vector<128x32xf32>
    %cst_41 = arith.constant dense<0xFF800000> : vector<128xf32>
    %168 = vector.multi_reduction <maximumf>, %167, %cst_41 [1] : vector<128x32xf32> to vector<128xf32>
    %169 = vector.shape_cast %168 : vector<128xf32> to vector<128x1xf32>
    %170 = vector.broadcast %169 : vector<128x1xf32> to vector<128x32xf32>
    %171 = arith.subf %167, %170 : vector<128x32xf32>
    %172 = math.exp %171 : vector<128x32xf32>
    %cst_42 = arith.constant dense<0.000000e+00> : vector<128xf32>
    %173 = vector.multi_reduction <add>, %172, %cst_42 [1] : vector<128x32xf32> to vector<128xf32>
    %174 = vector.shape_cast %173 : vector<128xf32> to vector<128x1xf32>
    %175 = tpu.reciprocal %174 {approx = true} : vector<128x1xf32> -> vector<128x1xf32>
    %176 = vector.broadcast %175 : vector<128x1xf32> to vector<128x32xf32>
    %177 = arith.mulf %172, %176 : vector<128x32xf32>
    %cst_43 = arith.constant dense<0.000000e+00> : vector<128x32xf32>
    %178 = tpu.matmul %177, %163, %cst_43 {dimension_numbers = #tpu.dot_dimension_numbers<[1], [0], [0], [1], [0, 0, 1, 1], [], []>} : vector<128x32xf32>, vector<32x32xf32>, vector<128x32xf32> -> vector<128x32xf32>
    %179 = vector.extract_strided_slice %178 {offsets = [0, 0], sizes = [32, 32], strides = [1, 1]} : vector<128x32xf32> to vector<32x32xf32>
    %180 = vector.extract_strided_slice %1 {offsets = [0, 0], sizes = [1, 32], strides = [1, 1]} : vector<128x32xf32> to vector<1x32xf32>
    %181 = vector.broadcast %180 : vector<1x32xf32> to vector<32x32xf32>
    %182 = arith.mulf %179, %181 : vector<32x32xf32>
    %183 = vector.extract_strided_slice %178 {offsets = [32, 0], sizes = [32, 32], strides = [1, 1]} : vector<128x32xf32> to vector<32x32xf32>
    %184 = vector.extract_strided_slice %1 {offsets = [32, 0], sizes = [1, 32], strides = [1, 1]} : vector<128x32xf32> to vector<1x32xf32>
    %185 = vector.broadcast %184 : vector<1x32xf32> to vector<32x32xf32>
    %186 = arith.mulf %183, %185 : vector<32x32xf32>
    %187 = arith.addf %182, %186 : vector<32x32xf32>
    %188 = vector.extract_strided_slice %178 {offsets = [64, 0], sizes = [32, 32], strides = [1, 1]} : vector<128x32xf32> to vector<32x32xf32>
    %189 = vector.extract_strided_slice %1 {offsets = [64, 0], sizes = [1, 32], strides = [1, 1]} : vector<128x32xf32> to vector<1x32xf32>
    %190 = vector.broadcast %189 : vector<1x32xf32> to vector<32x32xf32>
    %191 = arith.mulf %188, %190 : vector<32x32xf32>
    %192 = arith.addf %187, %191 : vector<32x32xf32>
    %193 = vector.extract_strided_slice %178 {offsets = [96, 0], sizes = [32, 32], strides = [1, 1]} : vector<128x32xf32> to vector<32x32xf32>
    %194 = vector.extract_strided_slice %1 {offsets = [96, 0], sizes = [1, 32], strides = [1, 1]} : vector<128x32xf32> to vector<1x32xf32>
    %195 = vector.broadcast %194 : vector<1x32xf32> to vector<32x32xf32>
    %196 = arith.mulf %193, %195 : vector<32x32xf32>
    %197 = arith.addf %192, %196 : vector<32x32xf32>
    %c304 = arith.constant 304 : index
    %c0_44 = arith.constant 0 : index
    %198 = vector.load %arg1[%c304, %c0_44] : memref<528x128xbf16, #tpu.memory_space<vmem>>, vector<32x32xbf16>
    %199 = arith.truncf %197 : vector<32x32xf32> to vector<32x32xbf16>
    %cst_45 = arith.constant dense<0.000000e+00> : vector<32x32xf32>
    %200 = tpu.matmul %199, %198, %cst_45 {dimension_numbers = #tpu.dot_dimension_numbers<[1], [0], [0], [1], [0, 0, 1, 1], [], []>} : vector<32x32xbf16>, vector<32x32xbf16>, vector<32x32xf32> -> vector<32x32xf32>
    %201 = arith.addf %130, %200 : vector<32x32xf32>
    %202 = vector.extract_strided_slice %0 {offsets = [12, 0], sizes = [1, 32], strides = [1, 1]} : vector<24x128xf32> to vector<1x32xf32>
    %203 = vector.broadcast %202 : vector<1x32xf32> to vector<32x32xf32>
    %204 = arith.addf %201, %203 : vector<32x32xf32>
    %205 = vector.extract_strided_slice %0 {offsets = [13, 0], sizes = [1, 32], strides = [1, 1]} : vector<24x128xf32> to vector<1x32xf32>
    %206 = vector.extract_strided_slice %0 {offsets = [14, 0], sizes = [1, 32], strides = [1, 1]} : vector<24x128xf32> to vector<1x32xf32>
    %cst_46 = arith.constant dense<0.000000e+00> : vector<32xf32>
    %207 = vector.multi_reduction <add>, %204, %cst_46 [1] : vector<32x32xf32> to vector<32xf32>
    %208 = vector.shape_cast %207 : vector<32xf32> to vector<32x1xf32>
    %cst_47 = arith.constant 3.200000e+01 : f32
    %209 = vector.broadcast %cst_47 : f32 to vector<32x1xf32>
    %210 = arith.divf %208, %209 : vector<32x1xf32>
    %211 = vector.broadcast %210 : vector<32x1xf32> to vector<32x32xf32>
    %212 = arith.subf %204, %211 : vector<32x32xf32>
    %213 = arith.mulf %212, %212 : vector<32x32xf32>
    %cst_48 = arith.constant dense<0.000000e+00> : vector<32xf32>
    %214 = vector.multi_reduction <add>, %213, %cst_48 [1] : vector<32x32xf32> to vector<32xf32>
    %215 = vector.shape_cast %214 : vector<32xf32> to vector<32x1xf32>
    %cst_49 = arith.constant 3.200000e+01 : f32
    %216 = vector.broadcast %cst_49 : f32 to vector<32x1xf32>
    %217 = arith.divf %215, %216 : vector<32x1xf32>
    %218 = vector.broadcast %210 : vector<32x1xf32> to vector<32x32xf32>
    %219 = arith.subf %204, %218 : vector<32x32xf32>
    %cst_50 = arith.constant 9.99999997E-7 : f32
    %220 = vector.broadcast %cst_50 : f32 to vector<32x1xf32>
    %221 = arith.addf %217, %220 : vector<32x1xf32>
    %222 = math.rsqrt %221 : vector<32x1xf32>
    %223 = vector.broadcast %222 : vector<32x1xf32> to vector<32x32xf32>
    %224 = arith.mulf %219, %223 : vector<32x32xf32>
    %225 = vector.broadcast %205 : vector<1x32xf32> to vector<32x32xf32>
    %226 = arith.mulf %224, %225 : vector<32x32xf32>
    %227 = vector.broadcast %206 : vector<1x32xf32> to vector<32x32xf32>
    %228 = arith.addf %226, %227 : vector<32x32xf32>
    %c336 = arith.constant 336 : index
    %c0_51 = arith.constant 0 : index
    %229 = vector.load %arg1[%c336, %c0_51] : memref<528x128xbf16, #tpu.memory_space<vmem>>, vector<32x128xbf16>
    %230 = arith.truncf %228 : vector<32x32xf32> to vector<32x32xbf16>
    %cst_52 = arith.constant dense<0.000000e+00> : vector<32x128xf32>
    %231 = tpu.matmul %230, %229, %cst_52 {dimension_numbers = #tpu.dot_dimension_numbers<[1], [0], [0], [1], [0, 0, 1, 1], [], []>} : vector<32x32xbf16>, vector<32x128xbf16>, vector<32x128xf32> -> vector<32x128xf32>
    %232 = vector.extract_strided_slice %0 {offsets = [15, 0], sizes = [1, 128], strides = [1, 1]} : vector<24x128xf32> to vector<1x128xf32>
    %233 = vector.broadcast %232 : vector<1x128xf32> to vector<32x128xf32>
    %234 = arith.addf %231, %233 : vector<32x128xf32>
    %cst_53 = arith.constant 5.000000e-01 : f32
    %235 = vector.broadcast %cst_53 : f32 to vector<32x128xf32>
    %236 = arith.mulf %235, %234 : vector<32x128xf32>
    %cst_54 = arith.constant 0.707106769 : f32
    %237 = vector.broadcast %cst_54 : f32 to vector<32x128xf32>
    %238 = arith.mulf %234, %237 : vector<32x128xf32>
    %239 = math.erf %238 : vector<32x128xf32>
    %cst_55 = arith.constant 1.000000e+00 : f32
    %240 = vector.broadcast %cst_55 : f32 to vector<32x128xf32>
    %241 = arith.addf %240, %239 : vector<32x128xf32>
    %242 = arith.mulf %236, %241 : vector<32x128xf32>
    %c368 = arith.constant 368 : index
    %c0_56 = arith.constant 0 : index
    %243 = vector.load %arg1[%c368, %c0_56] : memref<528x128xbf16, #tpu.memory_space<vmem>>, vector<128x32xbf16>
    %244 = arith.truncf %242 : vector<32x128xf32> to vector<32x128xbf16>
    %cst_57 = arith.constant dense<0.000000e+00> : vector<32x32xf32>
    %245 = tpu.matmul %244, %243, %cst_57 {dimension_numbers = #tpu.dot_dimension_numbers<[1], [0], [0], [1], [0, 0, 1, 1], [], []>} : vector<32x128xbf16>, vector<128x32xbf16>, vector<32x32xf32> -> vector<32x32xf32>
    %246 = arith.addf %204, %245 : vector<32x32xf32>
    %247 = vector.extract_strided_slice %0 {offsets = [16, 0], sizes = [1, 32], strides = [1, 1]} : vector<24x128xf32> to vector<1x32xf32>
    %248 = vector.broadcast %247 : vector<1x32xf32> to vector<32x32xf32>
    %249 = arith.addf %246, %248 : vector<32x32xf32>
    %cst_58 = arith.constant dense<0.000000e+00> : vector<2x32xf32>
    %250 = tpu.matmul %4, %249, %cst_58 {dimension_numbers = #tpu.dot_dimension_numbers<[1], [0], [0], [1], [0, 0, 1, 1], [], []>} : vector<2x32xf32>, vector<32x32xf32>, vector<2x32xf32> -> vector<2x32xf32>
    %251 = vector.extract_strided_slice %0 {offsets = [17, 0], sizes = [1, 32], strides = [1, 1]} : vector<24x128xf32> to vector<1x32xf32>
    %252 = vector.extract_strided_slice %0 {offsets = [18, 0], sizes = [1, 32], strides = [1, 1]} : vector<24x128xf32> to vector<1x32xf32>
    %cst_59 = arith.constant dense<0.000000e+00> : vector<2xf32>
    %253 = vector.multi_reduction <add>, %250, %cst_59 [1] : vector<2x32xf32> to vector<2xf32>
    %254 = vector.shape_cast %253 : vector<2xf32> to vector<2x1xf32>
    %cst_60 = arith.constant 3.200000e+01 : f32
    %255 = vector.broadcast %cst_60 : f32 to vector<2x1xf32>
    %256 = arith.divf %254, %255 : vector<2x1xf32>
    %257 = vector.broadcast %256 : vector<2x1xf32> to vector<2x32xf32>
    %258 = arith.subf %250, %257 : vector<2x32xf32>
    %259 = arith.mulf %258, %258 : vector<2x32xf32>
    %cst_61 = arith.constant dense<0.000000e+00> : vector<2xf32>
    %260 = vector.multi_reduction <add>, %259, %cst_61 [1] : vector<2x32xf32> to vector<2xf32>
    %261 = vector.shape_cast %260 : vector<2xf32> to vector<2x1xf32>
    %cst_62 = arith.constant 3.200000e+01 : f32
    %262 = vector.broadcast %cst_62 : f32 to vector<2x1xf32>
    %263 = arith.divf %261, %262 : vector<2x1xf32>
    %264 = vector.broadcast %256 : vector<2x1xf32> to vector<2x32xf32>
    %265 = arith.subf %250, %264 : vector<2x32xf32>
    %cst_63 = arith.constant 9.99999974E-6 : f32
    %266 = vector.broadcast %cst_63 : f32 to vector<2x1xf32>
    %267 = arith.addf %263, %266 : vector<2x1xf32>
    %268 = math.rsqrt %267 : vector<2x1xf32>
    %269 = vector.broadcast %268 : vector<2x1xf32> to vector<2x32xf32>
    %270 = arith.mulf %265, %269 : vector<2x32xf32>
    %271 = vector.broadcast %251 : vector<1x32xf32> to vector<2x32xf32>
    %272 = arith.mulf %270, %271 : vector<2x32xf32>
    %273 = vector.broadcast %252 : vector<1x32xf32> to vector<2x32xf32>
    %274 = arith.addf %272, %273 : vector<2x32xf32>
    %c496 = arith.constant 496 : index
    %c0_64 = arith.constant 0 : index
    %275 = vector.load %arg1[%c496, %c0_64] : memref<528x128xbf16, #tpu.memory_space<vmem>>, vector<32x128xbf16>
    %276 = arith.truncf %274 : vector<2x32xf32> to vector<2x32xbf16>
    %cst_65 = arith.constant dense<0.000000e+00> : vector<2x128xf32>
    %277 = tpu.matmul %276, %275, %cst_65 {dimension_numbers = #tpu.dot_dimension_numbers<[1], [0], [0], [1], [0, 0, 1, 1], [], []>} : vector<2x32xbf16>, vector<32x128xbf16>, vector<2x128xf32> -> vector<2x128xf32>
    %278 = vector.extract_strided_slice %0 {offsets = [19, 0], sizes = [1, 128], strides = [1, 1]} : vector<24x128xf32> to vector<1x128xf32>
    %279 = vector.broadcast %278 : vector<1x128xf32> to vector<2x128xf32>
    %280 = arith.addf %277, %279 : vector<2x128xf32>
    %c0_66 = arith.constant 0 : index
    %c0_67 = arith.constant 0 : index
    %281 = vector.load %arg3[%c0_66, %c0_67] : memref<2x128xf32, #tpu.memory_space<vmem>>, vector<2x128xf32>
    tpu.vector_store %arg3[%c0_66, %c0_67], %280 {strides = array<i32>} : memref<2x128xf32, #tpu.memory_space<vmem>>, vector<2x128xf32>,
    return
  }
}

</mosaic_0001>

<llo_original>
// kernel: base_vit_forward.1
$region0: #{base_vit_forward.1}
  #allocation0 [shape = 'u32[]', space=smem, size = 0x4, offset = 0x4, fixed_abs, tag = 'smem constant byte address 0x4 - core index']
  #allocation1 [shape = 'u32[144,128]{1,0:T(1,128)}', space=vmem, size = 0x12000, scoped, tag = 'internal scratch']
  %s0 = inlined_call_operand.vmem [shape: f32[32,48], index: 0, kind: input, shape index: {}]
  %s1 = inlined_call_operand.vmem [shape: bf16[528,128], index: 1, kind: input, shape index: {}]
  %s2 = inlined_call_operand.vmem [shape: f32[288,128], index: 2, kind: input, shape index: {}]
  %s3 = inlined_call_operand.hbm [shape: f32[2,128], index: 3, kind: output, shape index: {}]
  %s4 = sld [smem:[#allocation0]]
  $region22: #{base_vit_forward.1} parent=0
    _
  %s6 = ssub.s32 1, %s4
  %s7 = scalar_select 0, %s6, %s4
  $region1: #{base_vit_forward.1} parent=0
    #allocation2 [shape = 'u8[1024]{0}', space=vmem, size = 0x400, scoped, tag = 'output window, operand 0, single buffered']
    #allocation3 [shape = 's32[1]{0}', space=sflag, size = 0x4, scoped, tag = 'scoped memory for base_vit_forward.1']
    %8 = vsyncpa [#allocation3], 0
    // Predicated region
    $region2: #{base_vit_forward.1} parent=1 // pred_check
      _
    $region3: #{base_vit_forward.1} parent=1 // pred_check_branch
      %10 = sbr.rel (0) target = $region5
    $region4: #{base_vit_forward.1} parent=1 // pred_region
      _
    $region5: #{base_vit_forward.1} parent=1 // pred_fallthru
      _
    // Predicated region
    $region6: #{base_vit_forward.1} parent=1 // pred_check
      _
    $region7: #{base_vit_forward.1} parent=1 // pred_check_branch
      %12 = sbr.rel (0) target = $region9
    $region8: #{base_vit_forward.1} parent=1 // pred_region
      _
    $region9: #{base_vit_forward.1} parent=1 // pred_fallthru
      _
    // Predicated region
    $region10: #{base_vit_forward.1} parent=1 // pred_check
      _
    $region11: #{base_vit_forward.1} parent=1 // pred_check_branch
      %14 = sbr.rel (0) target = $region13
    $region12: #{base_vit_forward.1} parent=1 // pred_region
      _
    $region13: #{base_vit_forward.1} parent=1 // pred_fallthru
      _
    %v16 = vld [vmem:[%s2] sm:$0xff]
    %v17 = vld [vmem:[%s2 + $0x8] sm:$0xff]
    %v18 = vld [vmem:[%s2 + $0x10] sm:$0xff]
    %v19 = vld [vmem:[%s2 + $0x18] sm:$0xff]
    %v20 = vld [vmem:[%s2 + $0x20] sm:$0xff]
    %v21 = vld [vmem:[%s2 + $0x28] sm:$0xff]
    %v22 = vld [vmem:[%s2 + $0x30] sm:$0xff]
    %v23 = vld [vmem:[%s2 + $0x38] sm:$0xff]
    %v24 = vld [vmem:[%s2 + $0x40] sm:$0xff]
    %v25 = vld [vmem:[%s2 + $0x48] sm:$0xff]
    %v26 = vld [vmem:[%s2 + $0x50] sm:$0xff]
    %v27 = vld [vmem:[%s2 + $0x58] sm:$0xff]
    %v28 = vld [vmem:[%s2 + $0x60] sm:$0xff]
    %v29 = vld [vmem:[%s2 + $0x68] sm:$0xff]
    %v30 = vld [vmem:[%s2 + $0x70] sm:$0xff]
    %v31 = vld [vmem:[%s2 + $0x78] sm:$0xff]
    %v32 = vld [vmem:[%s2 + $0x80] sm:$0xff]
    %v33 = vld [vmem:[%s2 + $0x88] sm:$0xff]
    %v34 = vld [vmem:[%s2 + $0x90] sm:$0xff]
    %v35 = vld [vmem:[%s2 + $0x98] sm:$0xff]
    %v36 = vld [vmem:[%s2 + $0xa0] sm:$0xff]
    %v37 = vld [vmem:[%s2 + $0xa8] sm:$0xff]
    %v38 = vld [vmem:[%s2 + $0xb0] sm:$0xff]
    %v39 = vld [vmem:[%s2 + $0xb8] sm:$0xff]
    %v40 = vld [vmem:[%s2 + $0xc0] sm:$0xff]
    %v41 = vld [vmem:[%s2 + $0xc8] sm:$0xff]
    %v42 = vld [vmem:[%s2 + $0xd0] sm:$0xff]
    %v43 = vld [vmem:[%s2 + $0xd8] sm:$0xff]
    %v44 = vld [vmem:[%s2 + $0xe0] sm:$0xff]
    %v45 = vld [vmem:[%s2 + $0xe8] sm:$0xff]
    %v46 = vld [vmem:[%s2 + $0xf0] sm:$0xff]
    %v47 = vld [vmem:[%s2 + $0xf8] sm:$0xff]
    %v48 = vld [vmem:[%s2 + $0x100] sm:$0xff]
    %v49 = vld [vmem:[%s2 + $0x108] sm:$0xff]
    %v50 = vld [vmem:[%s2 + $0x110] sm:$0xff]
    %v51 = vld [vmem:[%s2 + $0x118] sm:$0xff]
    %v52 = vld [vmem:[%s0] sm:$0xff]
    %v53 = vld [vmem:[%s0 + $0x8] sm:$0xff]
    %v54 = vld [vmem:[%s0 + $0x10] sm:$0xff]
    %v55 = vld [vmem:[%s0 + $0x18] sm:$0xff]
    %v56 = vld [vmem:[%s1] sm:$0xf]
    %v57 = vld [vmem:[%s1 + $0x4] sm:$0xf]
    %v58 = vld [vmem:[%s1 + $0x8] sm:$0xf]
    %v59 = vld [vmem:[%s1 + $0xc] sm:$0xf]
    %v60 = vld [vmem:[%s1 + $0x10] sm:$0xf]
    %v61 = vld [vmem:[%s1 + $0x14] sm:$0xf]
    %v62 = vpack.c.bf16 %v53, %v52
    %v63 = vpack.c.bf16 %v55, %v54
    %v64 = vlaneseq
    %v65 = vshrl.u32 %v64, 7
    %v66 = vsub.s32 0, %v65
    %v67 = vrot.slane %v16, %v66
    %v74 = vunpack.c.l.b16 %v56
    %v75 = vunpack.c.l.b16 %v57
    %v76 = vunpack.c.l.b16 %v58
    %v77 = vunpack.c.l.b16 %v59
    %v78 = vunpack.c.l.b16 %v60
    %v79 = vunpack.c.l.b16 %v61
    %v80 = vpack.c.b16 %v75, %v74
    %v81 = vpack.c.b16 %v77, %v76
    %v82 = vpack.c.b16 %v79, %v78
    %vm86 = vcmask 392192
    %v88 = vsel %vm86, %v62, 0
    %v91 = vsel %vm86, %v63, 0
    %93 = vmatprep.subr.bf16.mxu0 0
    %94 = vmatpush1.bf16.msra.mxu0 %v80
    %95 = vmatprep.subr.bf16.mxu0 0
    %96 = vmatpush1.bf16.msra.mxu0 %v81
    %97 = vmatprep.subr.bf16.mxu0 0
    %98 = vmatpush1.bf16.msra.mxu0 %v82
    %99 = vmatprep.subr.bf16.mxu0 0
    %100 = vmatpush1.bf16.msra.mxu0 0
    %101 = vmatprep.subr.bf16.mxu0 0
    %102 = vmatpush1.bf16.msra.mxu0 0
    %103 = vmatprep.subr.bf16.mxu0 0
    %104 = vmatpush1.bf16.msra.mxu0 0
    %105 = vmatprep.subr.bf16.mxu0 0
    %106 = vmatpush1.bf16.msra.mxu0 0
    %107 = vmatprep.subr.bf16.mxu0 0
    %108 = vmatpush1.bf16.msra.mxu0 0
    %109 = vmatprep.subr.bf16.mxu0 0
    %110 = vmatpush1.bf16.msra.mxu0 0
    %111 = vmatprep.subr.bf16.mxu0 0
    %112 = vmatpush1.bf16.msra.mxu0 0
    %113 = vmatprep.subr.bf16.mxu0 0
    %114 = vmatpush1.bf16.msra.mxu0 0
    %115 = vmatprep.subr.bf16.mxu0 0
    %116 = vmatpush1.bf16.msra.mxu0 0
    %117 = vmatprep.subr.bf16.mxu0 0
    %118 = vmatpush1.bf16.msra.mxu0 0
    %119 = vmatprep.subr.bf16.mxu0 0
    %120 = vmatpush1.bf16.msra.mxu0 0
    %121 = vmatprep.subr.bf16.mxu0 0
    %122 = vmatpush1.bf16.msra.mxu0 0
    %123 = vmatprep.subr.bf16.mxu0 0
    %124 = vmatpush1.bf16.msra.mxu0 0
    %125 = vmatprep.mubr.bf16.mxu0 0
    %126 = vmatmul.mubr.bf16.gmra.mrb[0].mxu0 %v88
    %v127 = vpop.f32.mrb[0].mxu0
    %v128 = vadd.f32 %v67, %v127
    %v129 = vpop.f32.mrb[0].mxu0
    %v130 = vpop.f32.mrb[0].mxu0
    %v131 = vadd.f32 %v67, %v130
    %v132 = vpop.f32.mrb[0].mxu0
    %133 = vmatprep.mubr.bf16.mxu0 0
    %134 = vmatmul.mubr.bf16.gmra.mrb[0].mxu0 %v91
    %v135 = vpop.f32.mrb[0].mxu0
    %v136 = vadd.f32 %v67, %v135
    %v137 = vpop.f32.mrb[0].mxu0
    %v138 = vpop.f32.mrb[0].mxu0
    %v139 = vadd.f32 %v67, %v138
    %v140 = vpop.f32.mrb[0].mxu0
    %141 = vdwg.mxu0
    %vm142 = vcmask 261120
    %v143 = vsel %vm142, %v128, 0.0
    %144 = vadd.xlane.f32.xlu0 %v143
    %v145 = vpop.xlane.xlu0 %144
    %v146 = vsel %vm142, %v131, 0.0
    %147 = vadd.xlane.f32.xlu0 %v146
    %v148 = vpop.xlane.xlu0 %147
    %v149 = vsel %vm142, %v136, 0.0
    %150 = vadd.xlane.f32.xlu0 %v149
    %v151 = vpop.xlane.xlu0 %150
    %v152 = vsel %vm142, %v139, 0.0
    %153 = vadd.xlane.f32.xlu0 %v152
    %v154 = vpop.xlane.xlu0 %153
    %v155 = vrcp.pop 32.0
    %v156 = vmul.f32 %v145, %v155
    %v157 = vmul.f32 %v148, %v155
    %v158 = vmul.f32 %v151, %v155
    %v159 = vmul.f32 %v154, %v155
    %v160 = vsub.f32 %v128, %v156
    %v161 = vsub.f32 %v131, %v157
    %v162 = vsub.f32 %v136, %v158
    %v163 = vsub.f32 %v139, %v159
    %v164 = vmul.f32 %v160, %v160
    %v165 = vmul.f32 %v161, %v161
    %v166 = vmul.f32 %v162, %v162
    %v167 = vmul.f32 %v163, %v163
    %v168 = vsel %vm142, %v164, 0.0
    %169 = vadd.xlane.f32.xlu0 %v168
    %v170 = vpop.xlane.xlu0 %169
    %v171 = vsel %vm142, %v165, 0.0
    %172 = vadd.xlane.f32.xlu0 %v171
    %v173 = vpop.xlane.xlu0 %172
    %v174 = vsel %vm142, %v166, 0.0
    %175 = vadd.xlane.f32.xlu0 %v174
    %v176 = vpop.xlane.xlu0 %175
    %v177 = vsel %vm142, %v167, 0.0
    %178 = vadd.xlane.f32.xlu0 %v177
    %v179 = vpop.xlane.xlu0 %178
    %v180 = vmul.f32 %v170, %v155
    %v181 = vmul.f32 %v173, %v155
    %v182 = vmul.f32 %v176, %v155
    %v183 = vmul.f32 %v179, %v155
    %v184 = vadd.f32 %v180, 1e-06
    %v185 = vadd.f32 %v181, 1e-06
    %v186 = vadd.f32 %v182, 1e-06
    %v187 = vadd.f32 %v183, 1e-06
    %v188 = vrsqrt.pop %v184
    %v189 = vrsqrt.pop %v185
    %v190 = vrsqrt.pop %v186
    %v191 = vrsqrt.pop %v187
    %v192 = vmul.f32 %v160, %v188
    %v193 = vmul.f32 %v161, %v189
    %v194 = vmul.f32 %v162, %v190
    %v195 = vmul.f32 %v163, %v191
    %v196 = vlaneseq
    %v197 = vshrl.u32 %v196, 7
    %v198 = vsub.s32 1, %v197
    %v199 = vrot.slane %v16, %v198
    %v200 = vmul.f32 %v192, %v199
    %v201 = vmul.f32 %v193, %v199
    %v202 = vmul.f32 %v194, %v199
    %v203 = vmul.f32 %v195, %v199
    %v204 = vlaneseq
    %v205 = vshrl.u32 %v204, 7
    %v206 = vsub.s32 2, %v205
    %v207 = vrot.slane %v16, %v206
    %v208 = vadd.f32 %v200, %v207
    %v209 = vadd.f32 %v201, %v207
    %v210 = vadd.f32 %v202, %v207
    %v211 = vadd.f32 %v203, %v207
    %v212 = vld [vmem:[%s1 + $0x18] sm:$0xf]
    %v213 = vld [vmem:[%s1 + $0x1c] sm:$0xf]
    %v214 = vld [vmem:[%s1 + $0x20] sm:$0xf]
    %v215 = vld [vmem:[%s1 + $0x24] sm:$0xf]
    %v216 = vpack.c.bf16 %v209, %v208
    %v217 = vpack.c.bf16 %v211, %v210
    %v218 = vlaneseq
    %v219 = vshrl.u32 %v218, 7
    %v220 = vsub.s32 3, %v219
    %v221 = vrot.slane %v16, %v220
    %v226 = vunpack.c.l.b16 %v212
    %v227 = vunpack.c.l.b16 %v213
    %v228 = vunpack.c.l.b16 %v214
    %v229 = vunpack.c.l.b16 %v215
    %v230 = vpack.c.b16 %v227, %v226
    %v231 = vpack.c.b16 %v229, %v228
    %v235 = vsel %vm142, %v216, 0
    %v238 = vsel %vm142, %v217, 0
    %240 = vmatprep.subr.bf16.mxu0 0
    %241 = vmatpush1.bf16.msra.mxu0 %v230
    %242 = vmatprep.subr.bf16.mxu0 0
    %243 = vmatpush1.bf16.msra.mxu0 %v231
    %244 = vmatprep.subr.bf16.mxu0 0
    %245 = vmatpush1.bf16.msra.mxu0 0
    %246 = vmatprep.subr.bf16.mxu0 0
    %247 = vmatpush1.bf16.msra.mxu0 0
    %248 = vmatprep.subr.bf16.mxu0 0
    %249 = vmatpush1.bf16.msra.mxu0 0
    %250 = vmatprep.subr.bf16.mxu0 0
    %251 = vmatpush1.bf16.msra.mxu0 0
    %252 = vmatprep.subr.bf16.mxu0 0
    %253 = vmatpush1.bf16.msra.mxu0 0
    %254 = vmatprep.subr.bf16.mxu0 0
    %255 = vmatpush1.bf16.msra.mxu0 0
    %256 = vmatprep.subr.bf16.mxu0 0
    %257 = vmatpush1.bf16.msra.mxu0 0
    %258 = vmatprep.subr.bf16.mxu0 0
    %259 = vmatpush1.bf16.msra.mxu0 0
    %260 = vmatprep.subr.bf16.mxu0 0
    %261 = vmatpush1.bf16.msra.mxu0 0
    %262 = vmatprep.subr.bf16.mxu0 0
    %263 = vmatpush1.bf16.msra.mxu0 0
    %264 = vmatprep.subr.bf16.mxu0 0
    %265 = vmatpush1.bf16.msra.mxu0 0
    %266 = vmatprep.subr.bf16.mxu0 0
    %267 = vmatpush1.bf16.msra.mxu0 0
    %268 = vmatprep.subr.bf16.mxu0 0
    %269 = vmatpush1.bf16.msra.mxu0 0
    %270 = vmatprep.subr.bf16.mxu0 0
    %271 = vmatpush1.bf16.msra.mxu0 0
    %272 = vmatprep.mubr.bf16.mxu0 0
    %273 = vmatmul.mubr.bf16.gmra.mrb[0].mxu0 %v235
    %v274 = vpop.f32.mrb[0].mxu0
    %v275 = vadd.f32 %v221, %v274
    %v276 = vpop.f32.mrb[0].mxu0
    %v277 = vpop.f32.mrb[0].mxu0
    %v278 = vadd.f32 %v221, %v277
    %v279 = vpop.f32.mrb[0].mxu0
    %280 = vmatprep.mubr.bf16.mxu0 0
    %281 = vmatmul.mubr.bf16.gmra.mrb[0].mxu0 %v238
    %v282 = vpop.f32.mrb[0].mxu0
    %v283 = vadd.f32 %v221, %v282
    %v284 = vpop.f32.mrb[0].mxu0
    %v285 = vpop.f32.mrb[0].mxu0
    %v286 = vadd.f32 %v221, %v285
    %v287 = vpop.f32.mrb[0].mxu0
    %288 = vdwg.mxu0
    %v289 = vmul.f32 %v275, %v19
    %v290 = vmul.f32 %v278, %v20
    %v291 = vmul.f32 %v283, %v21
    %v292 = vmul.f32 %v286, %v22
    %v293 = vmul.f32 %v275, %v23
    %v294 = vmul.f32 %v278, %v24
    %v295 = vmul.f32 %v283, %v25
    %v296 = vmul.f32 %v286, %v26
    %v297 = vmul.f32 %v275, %v27
    %v298 = vmul.f32 %v278, %v28
    %v299 = vmul.f32 %v283, %v29
    %v300 = vmul.f32 %v286, %v30
    %v301 = vmul.f32 %v275, %v31
    %v302 = vmul.f32 %v278, %v32
    %v303 = vmul.f32 %v283, %v33
    %v304 = vmul.f32 %v286, %v34
    %309 = vrot.lane.b32.xlu0 %v275, 96
    %v310 = vpop.permute.xlu0 %309
    %311 = vrot.lane.b32.xlu0 %v278, 96
    %v312 = vpop.permute.xlu0 %311
    %313 = vrot.lane.b32.xlu0 %v283, 96
    %v314 = vpop.permute.xlu0 %313
    %315 = vrot.lane.b32.xlu0 %v286, 96
    %v316 = vpop.permute.xlu0 %315
    %v318 = vsel %vm142, %v289, 0
    %v321 = vsel %vm142, %v290, 0
    %v324 = vsel %vm142, %v291, 0
    %v327 = vsel %vm142, %v292, 0
    %v330 = vsel %vm142, %v293, 0
    %v333 = vsel %vm142, %v294, 0
    %v336 = vsel %vm142, %v295, 0
    %v339 = vsel %vm142, %v296, 0
    %v342 = vsel %vm142, %v297, 0
    %v345 = vsel %vm142, %v298, 0
    %v348 = vsel %vm142, %v299, 0
    %v351 = vsel %vm142, %v300, 0
    %v354 = vsel %vm142, %v301, 0
    %v357 = vsel %vm142, %v302, 0
    %v360 = vsel %vm142, %v303, 0
    %v363 = vsel %vm142, %v304, 0
    %v365 = vsel %vm142, %v310, 0
    %v367 = vsel %vm142, %v312, 0
    %v369 = vsel %vm142, %v314, 0
    %v371 = vsel %vm142, %v316, 0
    %373 = vmatprep.subr.mxu0 0.0
    %374 = vmatpush1.xpose.msra.mxu0 %v365
    %375 = vmatprep.subr.mxu0 0.0
    %376 = vmatpush1.xpose.msra.mxu0 %v367
    %377 = vmatprep.subr.mxu0 0.0
    %378 = vmatpush1.xpose.msra.mxu0 %v369
    %379 = vmatprep.subr.mxu0 0.0
    %380 = vmatpush1.xpose.msra.mxu0 %v371
    %381 = vmatprep.subr.mxu0 0.0
    %382 = vmatpush1.xpose.msra.mxu0 0.0
    %383 = vmatprep.subr.mxu0 0.0
    %384 = vmatpush1.xpose.msra.mxu0 0.0
    %385 = vmatprep.subr.mxu0 0.0
    %386 = vmatpush1.xpose.msra.mxu0 0.0
    %387 = vmatprep.subr.mxu0 0.0
    %388 = vmatpush1.xpose.msra.mxu0 0.0
    %389 = vmatprep.subr.mxu0 0.0
    %390 = vmatpush1.xpose.msra.mxu0 0.0
    %391 = vmatprep.subr.mxu0 0.0
    %392 = vmatpush1.xpose.msra.mxu0 0.0
    %393 = vmatprep.subr.mxu0 0.0
    %394 = vmatpush1.xpose.msra.mxu0 0.0
    %395 = vmatprep.subr.mxu0 0.0
    %396 = vmatpush1.xpose.msra.mxu0 0.0
    %397 = vmatprep.subr.mxu0 0.0
    %398 = vmatpush1.xpose.msra.mxu0 0.0
    %399 = vmatprep.subr.mxu0 0.0
    %400 = vmatpush1.xpose.msra.mxu0 0.0
    %401 = vmatprep.subr.mxu0 0.0
    %402 = vmatpush1.xpose.msra.mxu0 0.0
    %403 = vmatprep.subr.mxu0 0.0
    %404 = vmatpush1.xpose.msra.mxu0 0.0
    %405 = vmatprep.subr.mxu0 0.0
    %406 = vmatpush1.xpose.msra.mxu0 0.0
    %407 = vmatprep.subr.mxu0 0.0
    %408 = vmatpush1.xpose.msra.mxu0 0.0
    %409 = vmatprep.subr.mxu0 0.0
    %410 = vmatpush1.xpose.msra.mxu0 0.0
    %411 = vmatprep.subr.mxu0 0.0
    %412 = vmatpush1.xpose.msra.mxu0 0.0
    %413 = vmatprep.subr.mxu0 0.0
    %414 = vmatpush1.xpose.msra.mxu0 0.0
    %415 = vmatprep.subr.mxu0 0.0
    %416 = vmatpush1.xpose.msra.mxu0 0.0
    %417 = vmatprep.subr.mxu0 0.0
    %418 = vmatpush1.xpose.msra.mxu0 0.0
    %419 = vmatprep.subr.mxu0 0.0
    %420 = vmatpush1.xpose.msra.mxu0 0.0
    %421 = vmatprep.subr.mxu0 0.0
    %422 = vmatpush1.xpose.msra.mxu0 0.0
    %423 = vmatprep.subr.mxu0 0.0
    %424 = vmatpush1.xpose.msra.mxu0 0.0
    %425 = vmatprep.subr.mxu0 0.0
    %426 = vmatpush1.xpose.msra.mxu0 0.0
    %427 = vmatprep.subr.mxu0 0.0
    %428 = vmatpush1.xpose.msra.mxu0 0.0
    %429 = vmatprep.subr.mxu0 0.0
    %430 = vmatpush1.xpose.msra.mxu0 0.0
    %431 = vmatprep.subr.mxu0 0.0
    %432 = vmatpush1.xpose.msra.mxu0 0.0
    %433 = vmatprep.subr.mxu0 0.0
    %434 = vmatpush1.xpose.msra.mxu0 0.0
    %435 = vmatprep.subr.mxu0 0.0
    %436 = vmatpush1.xpose.msra.mxu0 0.0
    %437 = vmatprep.mubr.f32.mxu0 0.0
    %438 = vmatmul.mubr.f32.gmra.mrb[0].mxu0 %v318
    %v439 = vpop.f32.mrb[0].mxu0
    %v440 = vadd.f32 %v35, %v439
    %v441 = vpop.f32.mrb[0].mxu0
    %442 = vmatprep.mubr.f32.mxu0 0.0
    %443 = vmatmul.mubr.f32.gmra.mrb[0].mxu0 %v321
    %v444 = vpop.f32.mrb[0].mxu0
    %v445 = vadd.f32 %v36, %v444
    %v446 = vpop.f32.mrb[0].mxu0
    %447 = vmatprep.mubr.f32.mxu0 0.0
    %448 = vmatmul.mubr.f32.gmra.mrb[0].mxu0 %v324
    %v449 = vpop.f32.mrb[0].mxu0
    %v450 = vadd.f32 %v37, %v449
    %v451 = vpop.f32.mrb[0].mxu0
    %452 = vmatprep.mubr.f32.mxu0 0.0
    %453 = vmatmul.mubr.f32.gmra.mrb[0].mxu0 %v327
    %v454 = vpop.f32.mrb[0].mxu0
    %v455 = vadd.f32 %v38, %v454
    %v456 = vpop.f32.mrb[0].mxu0
    %457 = vmatprep.mubr.f32.mxu0 0.0
    %458 = vmatmul.mubr.f32.gmra.mrb[0].mxu0 %v330
    %v459 = vpop.f32.mrb[0].mxu0
    %v460 = vadd.f32 %v39, %v459
    %v461 = vpop.f32.mrb[0].mxu0
    %462 = vmatprep.mubr.f32.mxu0 0.0
    %463 = vmatmul.mubr.f32.gmra.mrb[0].mxu0 %v333
    %v464 = vpop.f32.mrb[0].mxu0
    %v465 = vadd.f32 %v40, %v464
    %v466 = vpop.f32.mrb[0].mxu0
    %467 = vmatprep.mubr.f32.mxu0 0.0
    %468 = vmatmul.mubr.f32.gmra.mrb[0].mxu0 %v336
    %v469 = vpop.f32.mrb[0].mxu0
    %v470 = vadd.f32 %v41, %v469
    %v471 = vpop.f32.mrb[0].mxu0
    %472 = vmatprep.mubr.f32.mxu0 0.0
    %473 = vmatmul.mubr.f32.gmra.mrb[0].mxu0 %v339
    %v474 = vpop.f32.mrb[0].mxu0
    %v475 = vadd.f32 %v42, %v474
    %v476 = vpop.f32.mrb[0].mxu0
    %477 = vmatprep.mubr.f32.mxu0 0.0
    %478 = vmatmul.mubr.f32.gmra.mrb[0].mxu0 %v342
    %v479 = vpop.f32.mrb[0].mxu0
    %v480 = vadd.f32 %v43, %v479
    %v481 = vpop.f32.mrb[0].mxu0
    %482 = vmatprep.mubr.f32.mxu0 0.0
    %483 = vmatmul.mubr.f32.gmra.mrb[0].mxu0 %v345
    %v484 = vpop.f32.mrb[0].mxu0
    %v485 = vadd.f32 %v44, %v484
    %v486 = vpop.f32.mrb[0].mxu0
    %487 = vmatprep.mubr.f32.mxu0 0.0
    %488 = vmatmul.mubr.f32.gmra.mrb[0].mxu0 %v348
    %v489 = vpop.f32.mrb[0].mxu0
    %v490 = vadd.f32 %v45, %v489
    %v491 = vpop.f32.mrb[0].mxu0
    %492 = vmatprep.mubr.f32.mxu0 0.0
    %493 = vmatmul.mubr.f32.gmra.mrb[0].mxu0 %v351
    %v494 = vpop.f32.mrb[0].mxu0
    %v495 = vadd.f32 %v46, %v494
    %v496 = vpop.f32.mrb[0].mxu0
    %497 = vmatprep.mubr.f32.mxu0 0.0
    %498 = vmatmul.mubr.f32.gmra.mrb[0].mxu0 %v354
    %v499 = vpop.f32.mrb[0].mxu0
    %v500 = vadd.f32 %v47, %v499
    %v501 = vpop.f32.mrb[0].mxu0
    %502 = vmatprep.mubr.f32.mxu0 0.0
    %503 = vmatmul.mubr.f32.gmra.mrb[0].mxu0 %v357
    %v504 = vpop.f32.mrb[0].mxu0
    %v505 = vadd.f32 %v48, %v504
    %v506 = vpop.f32.mrb[0].mxu0
    %507 = vmatprep.mubr.f32.mxu0 0.0
    %508 = vmatmul.mubr.f32.gmra.mrb[0].mxu0 %v360
    %v509 = vpop.f32.mrb[0].mxu0
    %v510 = vadd.f32 %v49, %v509
    %v511 = vpop.f32.mrb[0].mxu0
    %512 = vmatprep.mubr.f32.mxu0 0.0
    %513 = vmatmul.mubr.f32.gmra.mrb[0].mxu0 %v363
    %v514 = vpop.f32.mrb[0].mxu0
    %v515 = vadd.f32 %v50, %v514
    %v516 = vpop.f32.mrb[0].mxu0
    %517 = vdwg.mxu0
    %v518 = vsel %vm142, %v440, -inf
    %519 = vmax.xlane.f32.xlu0 %v518
    %v520 = vpop.xlane.xlu0 %519
    %v521 = vsel %vm142, %v445, -inf
    %522 = vmax.xlane.f32.xlu0 %v521
    %v523 = vpop.xlane.xlu0 %522
    %v524 = vsel %vm142, %v450, -inf
    %525 = vmax.xlane.f32.xlu0 %v524
    %v526 = vpop.xlane.xlu0 %525
    %v527 = vsel %vm142, %v455, -inf
    %528 = vmax.xlane.f32.xlu0 %v527
    %v529 = vpop.xlane.xlu0 %528
    %v530 = vsel %vm142, %v460, -inf
    %531 = vmax.xlane.f32.xlu0 %v530
    %v532 = vpop.xlane.xlu0 %531
    %v533 = vsel %vm142, %v465, -inf
    %534 = vmax.xlane.f32.xlu0 %v533
    %v535 = vpop.xlane.xlu0 %534
    %v536 = vsel %vm142, %v470, -inf
    %537 = vmax.xlane.f32.xlu0 %v536
    %v538 = vpop.xlane.xlu0 %537
    %v539 = vsel %vm142, %v475, -inf
    %540 = vmax.xlane.f32.xlu0 %v539
    %v541 = vpop.xlane.xlu0 %540
    %v542 = vsel %vm142, %v480, -inf
    %543 = vmax.xlane.f32.xlu0 %v542
    %v544 = vpop.xlane.xlu0 %543
    %v545 = vsel %vm142, %v485, -inf
    %546 = vmax.xlane.f32.xlu0 %v545
    %v547 = vpop.xlane.xlu0 %546
    %v548 = vsel %vm142, %v490, -inf
    %549 = vmax.xlane.f32.xlu0 %v548
    %v550 = vpop.xlane.xlu0 %549
    %v551 = vsel %vm142, %v495, -inf
    %552 = vmax.xlane.f32.xlu0 %v551
    %v553 = vpop.xlane.xlu0 %552
    %v554 = vsel %vm142, %v500, -inf
    %555 = vmax.xlane.f32.xlu0 %v554
    %v556 = vpop.xlane.xlu0 %555
    %v557 = vsel %vm142, %v505, -inf
    %558 = vmax.xlane.f32.xlu0 %v557
    %v559 = vpop.xlane.xlu0 %558
    %v560 = vsel %vm142, %v510, -inf
    %561 = vmax.xlane.f32.xlu0 %v560
    %v562 = vpop.xlane.xlu0 %561
    %v563 = vsel %vm142, %v515, -inf
    %564 = vmax.xlane.f32.xlu0 %v563
    %v565 = vpop.xlane.xlu0 %564
    %v566 = vsub.f32 %v440, %v520
    %v567 = vsub.f32 %v445, %v523
    %v568 = vsub.f32 %v450, %v526
    %v569 = vsub.f32 %v455, %v529
    %v570 = vsub.f32 %v460, %v532
    %v571 = vsub.f32 %v465, %v535
    %v572 = vsub.f32 %v470, %v538
    %v573 = vsub.f32 %v475, %v541
    %v574 = vsub.f32 %v480, %v544
    %v575 = vsub.f32 %v485, %v547
    %v576 = vsub.f32 %v490, %v550
    %v577 = vsub.f32 %v495, %v553
    %v578 = vsub.f32 %v500, %v556
    %v579 = vsub.f32 %v505, %v559
    %v580 = vsub.f32 %v510, %v562
    %v581 = vsub.f32 %v515, %v565
    %v582 = vmul.f32 %v566, 1.442695
    %v583 = vpow.pop %v582
    %v584 = vmul.f32 %v567, 1.442695
    %v585 = vpow.pop %v584
    %v586 = vmul.f32 %v568, 1.442695
    %v587 = vpow.pop %v586
    %v588 = vmul.f32 %v569, 1.442695
    %v589 = vpow.pop %v588
    %v590 = vmul.f32 %v570, 1.442695
    %v591 = vpow.pop %v590
    %v592 = vmul.f32 %v571, 1.442695
    %v593 = vpow.pop %v592
    %v594 = vmul.f32 %v572, 1.442695
    %v595 = vpow.pop %v594
    %v596 = vmul.f32 %v573, 1.442695
    %v597 = vpow.pop %v596
    %v598 = vmul.f32 %v574, 1.442695
    %v599 = vpow.pop %v598
    %v600 = vmul.f32 %v575, 1.442695
    %v601 = vpow.pop %v600
    %v602 = vmul.f32 %v576, 1.442695
    %v603 = vpow.pop %v602
    %v604 = vmul.f32 %v577, 1.442695
    %v605 = vpow.pop %v604
    %v606 = vmul.f32 %v578, 1.442695
    %v607 = vpow.pop %v606
    %v608 = vmul.f32 %v579, 1.442695
    %v609 = vpow.pop %v608
    %v610 = vmul.f32 %v580, 1.442695
    %v611 = vpow.pop %v610
    %v612 = vmul.f32 %v581, 1.442695
    %v613 = vpow.pop %v612
    %v614 = vsel %vm142, %v583, 0.0
    %615 = vadd.xlane.f32.xlu0 %v614
    %v616 = vpop.xlane.xlu0 %615
    %v617 = vsel %vm142, %v585, 0.0
    %618 = vadd.xlane.f32.xlu0 %v617
    %v619 = vpop.xlane.xlu0 %618
    %v620 = vsel %vm142, %v587, 0.0
    %621 = vadd.xlane.f32.xlu0 %v620
    %v622 = vpop.xlane.xlu0 %621
    %v623 = vsel %vm142, %v589, 0.0
    %624 = vadd.xlane.f32.xlu0 %v623
    %v625 = vpop.xlane.xlu0 %624
    %v626 = vsel %vm142, %v591, 0.0
    %627 = vadd.xlane.f32.xlu0 %v626
    %v628 = vpop.xlane.xlu0 %627
    %v629 = vsel %vm142, %v593, 0.0
    %630 = vadd.xlane.f32.xlu0 %v629
    %v631 = vpop.xlane.xlu0 %630
    %v632 = vsel %vm142, %v595, 0.0
    %633 = vadd.xlane.f32.xlu0 %v632
    %v634 = vpop.xlane.xlu0 %633
    %v635 = vsel %vm142, %v597, 0.0
    %636 = vadd.xlane.f32.xlu0 %v635
    %v637 = vpop.xlane.xlu0 %636
    %v638 = vsel %vm142, %v599, 0.0
    %639 = vadd.xlane.f32.xlu0 %v638
    %v640 = vpop.xlane.xlu0 %639
    %v641 = vsel %vm142, %v601, 0.0
    %642 = vadd.xlane.f32.xlu0 %v641
    %v643 = vpop.xlane.xlu0 %642
    %v644 = vsel %vm142, %v603, 0.0
    %645 = vadd.xlane.f32.xlu0 %v644
    %v646 = vpop.xlane.xlu0 %645
    %v647 = vsel %vm142, %v605, 0.0
    %648 = vadd.xlane.f32.xlu0 %v647
    %v649 = vpop.xlane.xlu0 %648
    %v650 = vsel %vm142, %v607, 0.0
    %651 = vadd.xlane.f32.xlu0 %v650
    %v652 = vpop.xlane.xlu0 %651
    %v653 = vsel %vm142, %v609, 0.0
    %654 = vadd.xlane.f32.xlu0 %v653
    %v655 = vpop.xlane.xlu0 %654
    %v656 = vsel %vm142, %v611, 0.0
    %657 = vadd.xlane.f32.xlu0 %v656
    %v658 = vpop.xlane.xlu0 %657
    %v659 = vsel %vm142, %v613, 0.0
    %660 = vadd.xlane.f32.xlu0 %v659
    %v661 = vpop.xlane.xlu0 %660
    %v662 = vrcp.pop %v616
    %v663 = vrcp.pop %v619
    %v664 = vrcp.pop %v622
    %v665 = vrcp.pop %v625
    %v666 = vrcp.pop %v628
    %v667 = vrcp.pop %v631
    %v668 = vrcp.pop %v634
    %v669 = vrcp.pop %v637
    %v670 = vrcp.pop %v640
    %v671 = vrcp.pop %v643
    %v672 = vrcp.pop %v646
    %v673 = vrcp.pop %v649
    %v674 = vrcp.pop %v652
    %v675 = vrcp.pop %v655
    %v676 = vrcp.pop %v658
    %v677 = vrcp.pop %v661
    %v678 = vmul.f32 %v583, %v662
    %v679 = vmul.f32 %v585, %v663
    %v680 = vmul.f32 %v587, %v664
    %v681 = vmul.f32 %v589, %v665
    %v682 = vmul.f32 %v591, %v666
    %v683 = vmul.f32 %v593, %v667
    %v684 = vmul.f32 %v595, %v668
    %v685 = vmul.f32 %v597, %v669
    %v686 = vmul.f32 %v599, %v670
    %v687 = vmul.f32 %v601, %v671
    %v688 = vmul.f32 %v603, %v672
    %v689 = vmul.f32 %v605, %v673
    %v690 = vmul.f32 %v607, %v674
    %v691 = vmul.f32 %v609, %v675
    %v692 = vmul.f32 %v611, %v676
    %v693 = vmul.f32 %v613, %v677
    %694 = vrot.lane.b32.xlu0 %v275, 64
    %v695 = vpop.permute.xlu0 %694
    %696 = vrot.lane.b32.xlu0 %v278, 64
    %v697 = vpop.permute.xlu0 %696
    %698 = vrot.lane.b32.xlu0 %v283, 64
    %v699 = vpop.permute.xlu0 %698
    %700 = vrot.lane.b32.xlu0 %v286, 64
    %v701 = vpop.permute.xlu0 %700
    %v707 = vsel %vm142, %v678, 0
    %v710 = vsel %vm142, %v679, 0
    %v713 = vsel %vm142, %v680, 0
    %v716 = vsel %vm142, %v681, 0
    %v719 = vsel %vm142, %v682, 0
    %v722 = vsel %vm142, %v683, 0
    %v725 = vsel %vm142, %v684, 0
    %v728 = vsel %vm142, %v685, 0
    %v731 = vsel %vm142, %v686, 0
    %v734 = vsel %vm142, %v687, 0
    %v737 = vsel %vm142, %v688, 0
    %v740 = vsel %vm142, %v689, 0
    %v743 = vsel %vm142, %v690, 0
    %v746 = vsel %vm142, %v691, 0
    %v749 = vsel %vm142, %v692, 0
    %v752 = vsel %vm142, %v693, 0
    %754 = vmatprep.subr.mxu0 0.0
    %755 = vmatpush1.msra.mxu0 %v695
    %756 = vmatprep.subr.mxu0 0.0
    %757 = vmatpush1.msra.mxu0 %v697
    %758 = vmatprep.subr.mxu0 0.0
    %759 = vmatpush1.msra.mxu0 %v699
    %760 = vmatprep.subr.mxu0 0.0
    %761 = vmatpush1.msra.mxu0 %v701
    %762 = vmatprep.subr.mxu0 0.0
    %763 = vmatpush1.msra.mxu0 0.0
    %764 = vmatprep.subr.mxu0 0.0
    %765 = vmatpush1.msra.mxu0 0.0
    %766 = vmatprep.subr.mxu0 0.0
    %767 = vmatpush1.msra.mxu0 0.0
    %768 = vmatprep.subr.mxu0 0.0
    %769 = vmatpush1.msra.mxu0 0.0
    %770 = vmatprep.subr.mxu0 0.0
    %771 = vmatpush1.msra.mxu0 0.0
    %772 = vmatprep.subr.mxu0 0.0
    %773 = vmatpush1.msra.mxu0 0.0
    %774 = vmatprep.subr.mxu0 0.0
    %775 = vmatpush1.msra.mxu0 0.0
    %776 = vmatprep.subr.mxu0 0.0
    %777 = vmatpush1.msra.mxu0 0.0
    %778 = vmatprep.subr.mxu0 0.0
    %779 = vmatpush1.msra.mxu0 0.0
    %780 = vmatprep.subr.mxu0 0.0
    %781 = vmatpush1.msra.mxu0 0.0
    %782 = vmatprep.subr.mxu0 0.0
    %783 = vmatpush1.msra.mxu0 0.0
    %784 = vmatprep.subr.mxu0 0.0
    %785 = vmatpush1.msra.mxu0 0.0
    %786 = vmatprep.subr.mxu0 0.0
    %787 = vmatpush1.msra.mxu0 0.0
    %788 = vmatprep.subr.mxu0 0.0
    %789 = vmatpush1.msra.mxu0 0.0
    %790 = vmatprep.subr.mxu0 0.0
    %791 = vmatpush1.msra.mxu0 0.0
    %792 = vmatprep.subr.mxu0 0.0
    %793 = vmatpush1.msra.mxu0 0.0
    %794 = vmatprep.subr.mxu0 0.0
    %795 = vmatpush1.msra.mxu0 0.0
    %796 = vmatprep.subr.mxu0 0.0
    %797 = vmatpush1.msra.mxu0 0.0
    %798 = vmatprep.subr.mxu0 0.0
    %799 = vmatpush1.msra.mxu0 0.0
    %800 = vmatprep.subr.mxu0 0.0
    %801 = vmatpush1.msra.mxu0 0.0
    %802 = vmatprep.subr.mxu0 0.0
    %803 = vmatpush1.msra.mxu0 0.0
    %804 = vmatprep.subr.mxu0 0.0
    %805 = vmatpush1.msra.mxu0 0.0
    %806 = vmatprep.subr.mxu0 0.0
    %807 = vmatpush1.msra.mxu0 0.0
    %808 = vmatprep.subr.mxu0 0.0
    %809 = vmatpush1.msra.mxu0 0.0
    %810 = vmatprep.subr.mxu0 0.0
    %811 = vmatpush1.msra.mxu0 0.0
    %812 = vmatprep.subr.mxu0 0.0
    %813 = vmatpush1.msra.mxu0 0.0
    %814 = vmatprep.subr.mxu0 0.0
    %815 = vmatpush1.msra.mxu0 0.0
    %816 = vmatprep.subr.mxu0 0.0
    %817 = vmatpush1.msra.mxu0 0.0
    %818 = vmatprep.mubr.f32.mxu0 0.0
    %819 = vmatmul.mubr.f32.gmra.mrb[0].mxu0 %v707
    %v820 = vpop.f32.mrb[0].mxu0
    %v821 = vadd.f32 0.0, %v820
    %v822 = vpop.f32.mrb[0].mxu0
    %823 = vmatprep.mubr.f32.mxu0 0.0
    %824 = vmatmul.mubr.f32.gmra.mrb[0].mxu0 %v710
    %v825 = vpop.f32.mrb[0].mxu0
    %v826 = vadd.f32 0.0, %v825
    %v827 = vpop.f32.mrb[0].mxu0
    %828 = vmatprep.mubr.f32.mxu0 0.0
    %829 = vmatmul.mubr.f32.gmra.mrb[0].mxu0 %v713
    %v830 = vpop.f32.mrb[0].mxu0
    %v831 = vadd.f32 0.0, %v830
    %v832 = vpop.f32.mrb[0].mxu0
    %833 = vmatprep.mubr.f32.mxu0 0.0
    %834 = vmatmul.mubr.f32.gmra.mrb[0].mxu0 %v716
    %v835 = vpop.f32.mrb[0].mxu0
    %v836 = vadd.f32 0.0, %v835
    %v837 = vpop.f32.mrb[0].mxu0
    %838 = vmatprep.mubr.f32.mxu0 0.0
    %839 = vmatmul.mubr.f32.gmra.mrb[0].mxu0 %v719
    %v840 = vpop.f32.mrb[0].mxu0
    %v841 = vadd.f32 0.0, %v840
    %v842 = vpop.f32.mrb[0].mxu0
    %843 = vmatprep.mubr.f32.mxu0 0.0
    %844 = vmatmul.mubr.f32.gmra.mrb[0].mxu0 %v722
    %v845 = vpop.f32.mrb[0].mxu0
    %v846 = vadd.f32 0.0, %v845
    %v847 = vpop.f32.mrb[0].mxu0
    %848 = vmatprep.mubr.f32.mxu0 0.0
    %849 = vmatmul.mubr.f32.gmra.mrb[0].mxu0 %v725
    %v850 = vpop.f32.mrb[0].mxu0
    %v851 = vadd.f32 0.0, %v850
    %v852 = vpop.f32.mrb[0].mxu0
    %853 = vmatprep.mubr.f32.mxu0 0.0
    %854 = vmatmul.mubr.f32.gmra.mrb[0].mxu0 %v728
    %v855 = vpop.f32.mrb[0].mxu0
    %v856 = vadd.f32 0.0, %v855
    %v857 = vpop.f32.mrb[0].mxu0
    %858 = vmatprep.mubr.f32.mxu0 0.0
    %859 = vmatmul.mubr.f32.gmra.mrb[0].mxu0 %v731
    %v860 = vpop.f32.mrb[0].mxu0
    %v861 = vadd.f32 0.0, %v860
    %v862 = vpop.f32.mrb[0].mxu0
    %863 = vmatprep.mubr.f32.mxu0 0.0
    %864 = vmatmul.mubr.f32.gmra.mrb[0].mxu0 %v734
    %v865 = vpop.f32.mrb[0].mxu0
    %v866 = vadd.f32 0.0, %v865
    %v867 = vpop.f32.mrb[0].mxu0
    %868 = vmatprep.mubr.f32.mxu0 0.0
    %869 = vmatmul.mubr.f32.gmra.mrb[0].mxu0 %v737
    %v870 = vpop.f32.mrb[0].mxu0
    %v871 = vadd.f32 0.0, %v870
    %v872 = vpop.f32.mrb[0].mxu0
    %873 = vmatprep.mubr.f32.mxu0 0.0
    %874 = vmatmul.mubr.f32.gmra.mrb[0].mxu0 %v740
    %v875 = vpop.f32.mrb[0].mxu0
    %v876 = vadd.f32 0.0, %v875
    %v877 = vpop.f32.mrb[0].mxu0
    %878 = vmatprep.mubr.f32.mxu0 0.0
    %879 = vmatmul.mubr.f32.gmra.mrb[0].mxu0 %v743
    %v880 = vpop.f32.mrb[0].mxu0
    %v881 = vadd.f32 0.0, %v880
    %v882 = vpop.f32.mrb[0].mxu0
    %883 = vmatprep.mubr.f32.mxu0 0.0
    %884 = vmatmul.mubr.f32.gmra.mrb[0].mxu0 %v746
    %v885 = vpop.f32.mrb[0].mxu0
    %v886 = vadd.f32 0.0, %v885
    %v887 = vpop.f32.mrb[0].mxu0
    %888 = vmatprep.mubr.f32.mxu0 0.0
    %889 = vmatmul.mubr.f32.gmra.mrb[0].mxu0 %v749
    %v890 = vpop.f32.mrb[0].mxu0
    %v891 = vadd.f32 0.0, %v890
    %v892 = vpop.f32.mrb[0].mxu0
    %893 = vmatprep.mubr.f32.mxu0 0.0
    %894 = vmatmul.mubr.f32.gmra.mrb[0].mxu0 %v752
    %v895 = vpop.f32.mrb[0].mxu0
    %v896 = vadd.f32 0.0, %v895
    %v897 = vpop.f32.mrb[0].mxu0
    %898 = vdwg.mxu0
    %v899 = vlaneseq
    %v900 = vshrl.u32 %v899, 7
    %v901 = vsub.s32 0, %v900
    %v902 = vrot.slane %v19, %v901
    %v903 = vmul.f32 %v821, %v902
    %v904 = vmul.f32 %v826, %v902
    %v905 = vmul.f32 %v831, %v902
    %v906 = vmul.f32 %v836, %v902
    %v907 = vlaneseq
    %v908 = vshrl.u32 %v907, 7
    %v909 = vsub.s32 0, %v908
    %v910 = vrot.slane %v23, %v909
    %v911 = vmul.f32 %v841, %v910
    %v912 = vmul.f32 %v846, %v910
    %v913 = vmul.f32 %v851, %v910
    %v914 = vmul.f32 %v856, %v910
    %v915 = vadd.f32 %v903, %v911
    %v916 = vadd.f32 %v904, %v912
    %v917 = vadd.f32 %v905, %v913
    %v918 = vadd.f32 %v906, %v914
    %v919 = vlaneseq
    %v920 = vshrl.u32 %v919, 7
    %v921 = vsub.s32 0, %v920
    %v922 = vrot.slane %v27, %v921
    %v923 = vmul.f32 %v861, %v922
    %v924 = vmul.f32 %v866, %v922
    %v925 = vmul.f32 %v871, %v922
    %v926 = vmul.f32 %v876, %v922
    %v927 = vadd.f32 %v915, %v923
    %v928 = vadd.f32 %v916, %v924
    %v929 = vadd.f32 %v917, %v925
    %v930 = vadd.f32 %v918, %v926
    %v931 = vlaneseq
    %v932 = vshrl.u32 %v931, 7
    %v933 = vsub.s32 0, %v932
    %v934 = vrot.slane %v31, %v933
    %v935 = vmul.f32 %v881, %v934
    %v936 = vmul.f32 %v886, %v934
    %v937 = vmul.f32 %v891, %v934
    %v938 = vmul.f32 %v896, %v934
    %v939 = vadd.f32 %v927, %v935
    %v940 = vadd.f32 %v928, %v936
    %v941 = vadd.f32 %v929, %v937
    %v942 = vadd.f32 %v930, %v938
    %v943 = vld [vmem:[%s1 + $0x28] sm:$0xf]
    %v944 = vld [vmem:[%s1 + $0x2c] sm:$0xf]
    %v945 = vld [vmem:[%s1 + $0x30] sm:$0xf]
    %v946 = vld [vmem:[%s1 + $0x34] sm:$0xf]
    %v947 = vpack.c.bf16 %v940, %v939
    %v948 = vpack.c.bf16 %v942, %v941
    %v953 = vunpack.c.l.b16 %v943
    %v954 = vunpack.c.l.b16 %v944
    %v955 = vunpack.c.l.b16 %v945
    %v956 = vunpack.c.l.b16 %v946
    %v957 = vpack.c.b16 %v954, %v953
    %v958 = vpack.c.b16 %v956, %v955
    %v962 = vsel %vm142, %v947, 0
    %v965 = vsel %vm142, %v948, 0
    %967 = vmatprep.subr.bf16.mxu0 0
    %968 = vmatpush1.bf16.msra.mxu0 %v957
    %969 = vmatprep.subr.bf16.mxu0 0
    %970 = vmatpush1.bf16.msra.mxu0 %v958
    %971 = vmatprep.subr.bf16.mxu0 0
    %972 = vmatpush1.bf16.msra.mxu0 0
    %973 = vmatprep.subr.bf16.mxu0 0
    %974 = vmatpush1.bf16.msra.mxu0 0
    %975 = vmatprep.subr.bf16.mxu0 0
    %976 = vmatpush1.bf16.msra.mxu0 0
    %977 = vmatprep.subr.bf16.mxu0 0
    %978 = vmatpush1.bf16.msra.mxu0 0
    %979 = vmatprep.subr.bf16.mxu0 0
    %980 = vmatpush1.bf16.msra.mxu0 0
    %981 = vmatprep.subr.bf16.mxu0 0
    %982 = vmatpush1.bf16.msra.mxu0 0
    %983 = vmatprep.subr.bf16.mxu0 0
    %984 = vmatpush1.bf16.msra.mxu0 0
    %985 = vmatprep.subr.bf16.mxu0 0
    %986 = vmatpush1.bf16.msra.mxu0 0
    %987 = vmatprep.subr.bf16.mxu0 0
    %988 = vmatpush1.bf16.msra.mxu0 0
    %989 = vmatprep.subr.bf16.mxu0 0
    %990 = vmatpush1.bf16.msra.mxu0 0
    %991 = vmatprep.subr.bf16.mxu0 0
    %992 = vmatpush1.bf16.msra.mxu0 0
    %993 = vmatprep.subr.bf16.mxu0 0
    %994 = vmatpush1.bf16.msra.mxu0 0
    %995 = vmatprep.subr.bf16.mxu0 0
    %996 = vmatpush1.bf16.msra.mxu0 0
    %997 = vmatprep.subr.bf16.mxu0 0
    %998 = vmatpush1.bf16.msra.mxu0 0
    %999 = vmatprep.mubr.bf16.mxu0 0
    %1000 = vmatmul.mubr.bf16.gmra.mrb[0].mxu0 %v962
    %v1001 = vpop.f32.mrb[0].mxu0
    %v1002 = vadd.f32 0.0, %v1001
    %v1003 = vpop.f32.mrb[0].mxu0
    %v1004 = vpop.f32.mrb[0].mxu0
    %v1005 = vadd.f32 0.0, %v1004
    %v1006 = vpop.f32.mrb[0].mxu0
    %1007 = vmatprep.mubr.bf16.mxu0 0
    %1008 = vmatmul.mubr.bf16.gmra.mrb[0].mxu0 %v965
    %v1009 = vpop.f32.mrb[0].mxu0
    %v1010 = vadd.f32 0.0, %v1009
    %v1011 = vpop.f32.mrb[0].mxu0
    %v1012 = vpop.f32.mrb[0].mxu0
    %v1013 = vadd.f32 0.0, %v1012
    %v1014 = vpop.f32.mrb[0].mxu0
    %1015 = vdwg.mxu0
    %v1016 = vadd.f32 %v128, %v1002
    %v1017 = vadd.f32 %v131, %v1005
    %v1018 = vadd.f32 %v136, %v1010
    %v1019 = vadd.f32 %v139, %v1013
    %v1020 = vlaneseq
    %v1021 = vshrl.u32 %v1020, 7
    %v1022 = vsub.s32 4, %v1021
    %v1023 = vrot.slane %v16, %v1022
    %v1024 = vadd.f32 %v1016, %v1023
    %v1025 = vadd.f32 %v1017, %v1023
    %v1026 = vadd.f32 %v1018, %v1023
    %v1027 = vadd.f32 %v1019, %v1023
    %v1028 = vsel %vm142, %v1024, 0.0
    %1029 = vadd.xlane.f32.xlu0 %v1028
    %v1030 = vpop.xlane.xlu0 %1029
    %v1031 = vsel %vm142, %v1025, 0.0
    %1032 = vadd.xlane.f32.xlu0 %v1031
    %v1033 = vpop.xlane.xlu0 %1032
    %v1034 = vsel %vm142, %v1026, 0.0
    %1035 = vadd.xlane.f32.xlu0 %v1034
    %v1036 = vpop.xlane.xlu0 %1035
    %v1037 = vsel %vm142, %v1027, 0.0
    %1038 = vadd.xlane.f32.xlu0 %v1037
    %v1039 = vpop.xlane.xlu0 %1038
    %v1040 = vmul.f32 %v1030, %v155
    %v1041 = vmul.f32 %v1033, %v155
    %v1042 = vmul.f32 %v1036, %v155
    %v1043 = vmul.f32 %v1039, %v155
    %v1044 = vsub.f32 %v1024, %v1040
    %v1045 = vsub.f32 %v1025, %v1041
    %v1046 = vsub.f32 %v1026, %v1042
    %v1047 = vsub.f32 %v1027, %v1043
    %v1048 = vmul.f32 %v1044, %v1044
    %v1049 = vmul.f32 %v1045, %v1045
    %v1050 = vmul.f32 %v1046, %v1046
    %v1051 = vmul.f32 %v1047, %v1047
    %v1052 = vsel %vm142, %v1048, 0.0
    %1053 = vadd.xlane.f32.xlu0 %v1052
    %v1054 = vpop.xlane.xlu0 %1053
    %v1055 = vsel %vm142, %v1049, 0.0
    %1056 = vadd.xlane.f32.xlu0 %v1055
    %v1057 = vpop.xlane.xlu0 %1056
    %v1058 = vsel %vm142, %v1050, 0.0
    %1059 = vadd.xlane.f32.xlu0 %v1058
    %v1060 = vpop.xlane.xlu0 %1059
    %v1061 = vsel %vm142, %v1051, 0.0
    %1062 = vadd.xlane.f32.xlu0 %v1061
    %v1063 = vpop.xlane.xlu0 %1062
    %v1064 = vmul.f32 %v1054, %v155
    %v1065 = vmul.f32 %v1057, %v155
    %v1066 = vmul.f32 %v1060, %v155
    %v1067 = vmul.f32 %v1063, %v155
    %v1068 = vadd.f32 %v1064, 1e-06
    %v1069 = vadd.f32 %v1065, 1e-06
    %v1070 = vadd.f32 %v1066, 1e-06
    %v1071 = vadd.f32 %v1067, 1e-06
    %v1072 = vrsqrt.pop %v1068
    %v1073 = vrsqrt.pop %v1069
    %v1074 = vrsqrt.pop %v1070
    %v1075 = vrsqrt.pop %v1071
    %v1076 = vmul.f32 %v1044, %v1072
    %v1077 = vmul.f32 %v1045, %v1073
    %v1078 = vmul.f32 %v1046, %v1074
    %v1079 = vmul.f32 %v1047, %v1075
    %v1080 = vlaneseq
    %v1081 = vshrl.u32 %v1080, 7
    %v1082 = vsub.s32 5, %v1081
    %v1083 = vrot.slane %v16, %v1082
    %v1084 = vmul.f32 %v1076, %v1083
    %v1085 = vmul.f32 %v1077, %v1083
    %v1086 = vmul.f32 %v1078, %v1083
    %v1087 = vmul.f32 %v1079, %v1083
    %v1088 = vlaneseq
    %v1089 = vshrl.u32 %v1088, 7
    %v1090 = vsub.s32 6, %v1089
    %v1091 = vrot.slane %v16, %v1090
    %v1092 = vadd.f32 %v1084, %v1091
    %v1093 = vadd.f32 %v1085, %v1091
    %v1094 = vadd.f32 %v1086, %v1091
    %v1095 = vadd.f32 %v1087, %v1091
    %v1096 = vld [vmem:[%s1 + $0x38] sm:$0xf]
    %v1097 = vld [vmem:[%s1 + $0x3c] sm:$0xf]
    %v1098 = vld [vmem:[%s1 + $0x40] sm:$0xf]
    %v1099 = vld [vmem:[%s1 + $0x44] sm:$0xf]
    %v1100 = vpack.c.bf16 %v1093, %v1092
    %v1101 = vpack.c.bf16 %v1095, %v1094
    %v1102 = vlaneseq
    %v1103 = vshrl.u32 %v1102, 7
    %v1104 = vsub.s32 7, %v1103
    %v1105 = vrot.slane %v16, %v1104
    %v1110 = vunpack.c.l.b16 %v1096
    %v1111 = vunpack.c.l.b16 %v1097
    %v1112 = vunpack.c.l.b16 %v1098
    %v1113 = vunpack.c.l.b16 %v1099
    %v1114 = vpack.c.b16 %v1111, %v1110
    %v1115 = vpack.c.b16 %v1113, %v1112
    %v1119 = vsel %vm142, %v1100, 0
    %v1122 = vsel %vm142, %v1101, 0
    %1124 = vmatprep.subr.bf16.mxu0 0
    %1125 = vmatpush1.bf16.msra.mxu0 %v1114
    %1126 = vmatprep.subr.bf16.mxu0 0
    %1127 = vmatpush1.bf16.msra.mxu0 %v1115
    %1128 = vmatprep.subr.bf16.mxu0 0
    %1129 = vmatpush1.bf16.msra.mxu0 0
    %1130 = vmatprep.subr.bf16.mxu0 0
    %1131 = vmatpush1.bf16.msra.mxu0 0
    %1132 = vmatprep.subr.bf16.mxu0 0
    %1133 = vmatpush1.bf16.msra.mxu0 0
    %1134 = vmatprep.subr.bf16.mxu0 0
    %1135 = vmatpush1.bf16.msra.mxu0 0
    %1136 = vmatprep.subr.bf16.mxu0 0
    %1137 = vmatpush1.bf16.msra.mxu0 0
    %1138 = vmatprep.subr.bf16.mxu0 0
    %1139 = vmatpush1.bf16.msra.mxu0 0
    %1140 = vmatprep.subr.bf16.mxu0 0
    %1141 = vmatpush1.bf16.msra.mxu0 0
    %1142 = vmatprep.subr.bf16.mxu0 0
    %1143 = vmatpush1.bf16.msra.mxu0 0
    %1144 = vmatprep.subr.bf16.mxu0 0
    %1145 = vmatpush1.bf16.msra.mxu0 0
    %1146 = vmatprep.subr.bf16.mxu0 0
    %1147 = vmatpush1.bf16.msra.mxu0 0
    %1148 = vmatprep.subr.bf16.mxu0 0
    %1149 = vmatpush1.bf16.msra.mxu0 0
    %1150 = vmatprep.subr.bf16.mxu0 0
    %1151 = vmatpush1.bf16.msra.mxu0 0
    %1152 = vmatprep.subr.bf16.mxu0 0
    %1153 = vmatpush1.bf16.msra.mxu0 0
    %1154 = vmatprep.subr.bf16.mxu0 0
    %1155 = vmatpush1.bf16.msra.mxu0 0
    %1156 = vmatprep.mubr.bf16.mxu0 0
    %1157 = vmatmul.mubr.bf16.gmra.mrb[0].mxu0 %v1119
    %v1158 = vpop.f32.mrb[0].mxu0
    %v1159 = vadd.f32 %v1105, %v1158
    %v1160 = vpop.f32.mrb[0].mxu0
    %v1161 = vpop.f32.mrb[0].mxu0
    %v1162 = vadd.f32 %v1105, %v1161
    %v1163 = vpop.f32.mrb[0].mxu0
    %1164 = vmatprep.mubr.bf16.mxu0 0
    %1165 = vmatmul.mubr.bf16.gmra.mrb[0].mxu0 %v1122
    %v1166 = vpop.f32.mrb[0].mxu0
    %v1167 = vadd.f32 %v1105, %v1166
    %v1168 = vpop.f32.mrb[0].mxu0
    %v1169 = vpop.f32.mrb[0].mxu0
    %v1170 = vadd.f32 %v1105, %v1169
    %v1171 = vpop.f32.mrb[0].mxu0
    %1172 = vdwg.mxu0
    %v1173 = vmul.f32 %v1159, 0.5
    %v1174 = vmul.f32 %v1162, 0.5
    %v1175 = vmul.f32 %v1167, 0.5
    %v1176 = vmul.f32 %v1170, 0.5
    %v1177 = vmul.f32 %v1159, 0.70710677
    %v1178 = vmul.f32 %v1162, 0.70710677
    %v1179 = vmul.f32 %v1167, 0.70710677
    %v1180 = vmul.f32 %v1170, 0.70710677
    %v1181 = verf.f32.pop %v1177
    %v1182 = verf.f32.pop %v1178
    %v1183 = verf.f32.pop %v1179
    %v1184 = verf.f32.pop %v1180
    %v1185 = vadd.f32 %v1181, 1.0
    %v1186 = vadd.f32 %v1182, 1.0
    %v1187 = vadd.f32 %v1183, 1.0
    %v1188 = vadd.f32 %v1184, 1.0
    %v1189 = vmul.f32 %v1173, %v1185
    %v1190 = vmul.f32 %v1174, %v1186
    %v1191 = vmul.f32 %v1175, %v1187
    %v1192 = vmul.f32 %v1176, %v1188
    %v1193 = vld [vmem:[%s1 + $0x48] sm:$0xf]
    %v1194 = vld [vmem:[%s1 + $0x4c] sm:$0xf]
    %v1195 = vld [vmem:[%s1 + $0x50] sm:$0xf]
    %v1196 = vld [vmem:[%s1 + $0x54] sm:$0xf]
    %v1197 = vld [vmem:[%s1 + $0x58] sm:$0xf]
    %v1198 = vld [vmem:[%s1 + $0x5c] sm:$0xf]
    %v1199 = vld [vmem:[%s1 + $0x60] sm:$0xf]
    %v1200 = vld [vmem:[%s1 + $0x64] sm:$0xf]
    %v1201 = vld [vmem:[%s1 + $0x68] sm:$0xf]
    %v1202 = vld [vmem:[%s1 + $0x6c] sm:$0xf]
    %v1203 = vld [vmem:[%s1 + $0x70] sm:$0xf]
    %v1204 = vld [vmem:[%s1 + $0x74] sm:$0xf]
    %v1205 = vld [vmem:[%s1 + $0x78] sm:$0xf]
    %v1206 = vld [vmem:[%s1 + $0x7c] sm:$0xf]
    %v1207 = vld [vmem:[%s1 + $0x80] sm:$0xf]
    %v1208 = vld [vmem:[%s1 + $0x84] sm:$0xf]
    %v1209 = vpack.c.bf16 %v1190, %v1189
    %v1210 = vpack.c.bf16 %v1192, %v1191
    %v1227 = vunpack.c.l.b16 %v1193
    %v1228 = vunpack.c.l.b16 %v1194
    %v1229 = vunpack.c.l.b16 %v1195
    %v1230 = vunpack.c.l.b16 %v1196
    %v1231 = vunpack.c.l.b16 %v1197
    %v1232 = vunpack.c.l.b16 %v1198
    %v1233 = vunpack.c.l.b16 %v1199
    %v1234 = vunpack.c.l.b16 %v1200
    %v1235 = vunpack.c.l.b16 %v1201
    %v1236 = vunpack.c.l.b16 %v1202
    %v1237 = vunpack.c.l.b16 %v1203
    %v1238 = vunpack.c.l.b16 %v1204
    %v1239 = vunpack.c.l.b16 %v1205
    %v1240 = vunpack.c.l.b16 %v1206
    %v1241 = vunpack.c.l.b16 %v1207
    %v1242 = vunpack.c.l.b16 %v1208
    %v1243 = vpack.c.b16 %v1228, %v1227
    %v1244 = vpack.c.b16 %v1230, %v1229
    %v1245 = vpack.c.b16 %v1232, %v1231
    %v1246 = vpack.c.b16 %v1234, %v1233
    %v1247 = vpack.c.b16 %v1236, %v1235
    %v1248 = vpack.c.b16 %v1238, %v1237
    %v1249 = vpack.c.b16 %v1240, %v1239
    %v1250 = vpack.c.b16 %v1242, %v1241
    %1259 = vmatprep.subr.bf16.mxu0 0
    %1260 = vmatpush1.bf16.msra.mxu0 %v1243
    %1261 = vmatprep.subr.bf16.mxu0 0
    %1262 = vmatpush1.bf16.msra.mxu0 %v1244
    %1263 = vmatprep.subr.bf16.mxu0 0
    %1264 = vmatpush1.bf16.msra.mxu0 %v1245
    %1265 = vmatprep.subr.bf16.mxu0 0
    %1266 = vmatpush1.bf16.msra.mxu0 %v1246
    %1267 = vmatprep.subr.bf16.mxu0 0
    %1268 = vmatpush1.bf16.msra.mxu0 %v1247
    %1269 = vmatprep.subr.bf16.mxu0 0
    %1270 = vmatpush1.bf16.msra.mxu0 %v1248
    %1271 = vmatprep.subr.bf16.mxu0 0
    %1272 = vmatpush1.bf16.msra.mxu0 %v1249
    %1273 = vmatprep.subr.bf16.mxu0 0
    %1274 = vmatpush1.bf16.msra.mxu0 %v1250
    %1275 = vmatprep.subr.bf16.mxu0 0
    %1276 = vmatpush1.bf16.msra.mxu0 0
    %1277 = vmatprep.subr.bf16.mxu0 0
    %1278 = vmatpush1.bf16.msra.mxu0 0
    %1279 = vmatprep.subr.bf16.mxu0 0
    %1280 = vmatpush1.bf16.msra.mxu0 0
    %1281 = vmatprep.subr.bf16.mxu0 0
    %1282 = vmatpush1.bf16.msra.mxu0 0
    %1283 = vmatprep.subr.bf16.mxu0 0
    %1284 = vmatpush1.bf16.msra.mxu0 0
    %1285 = vmatprep.subr.bf16.mxu0 0
    %1286 = vmatpush1.bf16.msra.mxu0 0
    %1287 = vmatprep.subr.bf16.mxu0 0
    %1288 = vmatpush1.bf16.msra.mxu0 0
    %1289 = vmatprep.subr.bf16.mxu0 0
    %1290 = vmatpush1.bf16.msra.mxu0 0
    %1291 = vmatprep.mubr.bf16.mxu0 0
    %1292 = vmatmul.mubr.bf16.gmra.mrb[0].mxu0 %v1209
    %v1293 = vpop.f32.mrb[0].mxu0
    %v1294 = vadd.f32 0.0, %v1293
    %v1295 = vpop.f32.mrb[0].mxu0
    %v1296 = vpop.f32.mrb[0].mxu0
    %v1297 = vadd.f32 0.0, %v1296
    %v1298 = vpop.f32.mrb[0].mxu0
    %1299 = vmatprep.mubr.bf16.mxu0 0
    %1300 = vmatmul.mubr.bf16.gmra.mrb[0].mxu0 %v1210
    %v1301 = vpop.f32.mrb[0].mxu0
    %v1302 = vadd.f32 0.0, %v1301
    %v1303 = vpop.f32.mrb[0].mxu0
    %v1304 = vpop.f32.mrb[0].mxu0
    %v1305 = vadd.f32 0.0, %v1304
    %v1306 = vpop.f32.mrb[0].mxu0
    %1307 = vdwg.mxu0
    %v1308 = vadd.f32 %v1024, %v1294
    %v1309 = vadd.f32 %v1025, %v1297
    %v1310 = vadd.f32 %v1026, %v1302
    %v1311 = vadd.f32 %v1027, %v1305
    %v1312 = vlaneseq
    %v1313 = vshrl.u32 %v1312, 7
    %v1314 = vsub.s32 0, %v1313
    %v1315 = vrot.slane %v17, %v1314
    %v1316 = vadd.f32 %v1308, %v1315
    %v1317 = vadd.f32 %v1309, %v1315
    %v1318 = vadd.f32 %v1310, %v1315
    %v1319 = vadd.f32 %v1311, %v1315
    %v1320 = vsel %vm142, %v1316, 0.0
    %1321 = vadd.xlane.f32.xlu0 %v1320
    %v1322 = vpop.xlane.xlu0 %1321
    %v1323 = vsel %vm142, %v1317, 0.0
    %1324 = vadd.xlane.f32.xlu0 %v1323
    %v1325 = vpop.xlane.xlu0 %1324
    %v1326 = vsel %vm142, %v1318, 0.0
    %1327 = vadd.xlane.f32.xlu0 %v1326
    %v1328 = vpop.xlane.xlu0 %1327
    %v1329 = vsel %vm142, %v1319, 0.0
    %1330 = vadd.xlane.f32.xlu0 %v1329
    %v1331 = vpop.xlane.xlu0 %1330
    %v1332 = vmul.f32 %v1322, %v155
    %v1333 = vmul.f32 %v1325, %v155
    %v1334 = vmul.f32 %v1328, %v155
    %v1335 = vmul.f32 %v1331, %v155
    %v1336 = vsub.f32 %v1316, %v1332
    %v1337 = vsub.f32 %v1317, %v1333
    %v1338 = vsub.f32 %v1318, %v1334
    %v1339 = vsub.f32 %v1319, %v1335
    %v1340 = vmul.f32 %v1336, %v1336
    %v1341 = vmul.f32 %v1337, %v1337
    %v1342 = vmul.f32 %v1338, %v1338
    %v1343 = vmul.f32 %v1339, %v1339
    %v1344 = vsel %vm142, %v1340, 0.0
    %1345 = vadd.xlane.f32.xlu0 %v1344
    %v1346 = vpop.xlane.xlu0 %1345
    %v1347 = vsel %vm142, %v1341, 0.0
    %1348 = vadd.xlane.f32.xlu0 %v1347
    %v1349 = vpop.xlane.xlu0 %1348
    %v1350 = vsel %vm142, %v1342, 0.0
    %1351 = vadd.xlane.f32.xlu0 %v1350
    %v1352 = vpop.xlane.xlu0 %1351
    %v1353 = vsel %vm142, %v1343, 0.0
    %1354 = vadd.xlane.f32.xlu0 %v1353
    %v1355 = vpop.xlane.xlu0 %1354
    %v1356 = vmul.f32 %v1346, %v155
    %v1357 = vmul.f32 %v1349, %v155
    %v1358 = vmul.f32 %v1352, %v155
    %v1359 = vmul.f32 %v1355, %v155
    %v1360 = vadd.f32 %v1356, 1e-06
    %v1361 = vadd.f32 %v1357, 1e-06
    %v1362 = vadd.f32 %v1358, 1e-06
    %v1363 = vadd.f32 %v1359, 1e-06
    %v1364 = vrsqrt.pop %v1360
    %v1365 = vrsqrt.pop %v1361
    %v1366 = vrsqrt.pop %v1362
    %v1367 = vrsqrt.pop %v1363
    %v1368 = vmul.f32 %v1336, %v1364
    %v1369 = vmul.f32 %v1337, %v1365
    %v1370 = vmul.f32 %v1338, %v1366
    %v1371 = vmul.f32 %v1339, %v1367
    %v1372 = vlaneseq
    %v1373 = vshrl.u32 %v1372, 7
    %v1374 = vsub.s32 1, %v1373
    %v1375 = vrot.slane %v17, %v1374
    %v1376 = vmul.f32 %v1368, %v1375
    %v1377 = vmul.f32 %v1369, %v1375
    %v1378 = vmul.f32 %v1370, %v1375
    %v1379 = vmul.f32 %v1371, %v1375
    %v1380 = vlaneseq
    %v1381 = vshrl.u32 %v1380, 7
    %v1382 = vsub.s32 2, %v1381
    %v1383 = vrot.slane %v17, %v1382
    %v1384 = vadd.f32 %v1376, %v1383
    %v1385 = vadd.f32 %v1377, %v1383
    %v1386 = vadd.f32 %v1378, %v1383
    %v1387 = vadd.f32 %v1379, %v1383
    %v1388 = vld [vmem:[%s1 + $0x88] sm:$0xf]
    %v1389 = vld [vmem:[%s1 + $0x8c] sm:$0xf]
    %v1390 = vld [vmem:[%s1 + $0x90] sm:$0xf]
    %v1391 = vld [vmem:[%s1 + $0x94] sm:$0xf]
    %v1392 = vpack.c.bf16 %v1385, %v1384
    %v1393 = vpack.c.bf16 %v1387, %v1386
    %v1394 = vlaneseq
    %v1395 = vshrl.u32 %v1394, 7
    %v1396 = vsub.s32 3, %v1395
    %v1397 = vrot.slane %v17, %v1396
    %v1402 = vunpack.c.l.b16 %v1388
    %v1403 = vunpack.c.l.b16 %v1389
    %v1404 = vunpack.c.l.b16 %v1390
    %v1405 = vunpack.c.l.b16 %v1391
    %v1406 = vpack.c.b16 %v1403, %v1402
    %v1407 = vpack.c.b16 %v1405, %v1404
    %v1411 = vsel %vm142, %v1392, 0
    %v1414 = vsel %vm142, %v1393, 0
    %1416 = vmatprep.subr.bf16.mxu0 0
    %1417 = vmatpush1.bf16.msra.mxu0 %v1406
    %1418 = vmatprep.subr.bf16.mxu0 0
    %1419 = vmatpush1.bf16.msra.mxu0 %v1407
    %1420 = vmatprep.subr.bf16.mxu0 0
    %1421 = vmatpush1.bf16.msra.mxu0 0
    %1422 = vmatprep.subr.bf16.mxu0 0
    %1423 = vmatpush1.bf16.msra.mxu0 0
    %1424 = vmatprep.subr.bf16.mxu0 0
    %1425 = vmatpush1.bf16.msra.mxu0 0
    %1426 = vmatprep.subr.bf16.mxu0 0
    %1427 = vmatpush1.bf16.msra.mxu0 0
    %1428 = vmatprep.subr.bf16.mxu0 0
    %1429 = vmatpush1.bf16.msra.mxu0 0
    %1430 = vmatprep.subr.bf16.mxu0 0
    %1431 = vmatpush1.bf16.msra.mxu0 0
    %1432 = vmatprep.subr.bf16.mxu0 0
    %1433 = vmatpush1.bf16.msra.mxu0 0
    %1434 = vmatprep.subr.bf16.mxu0 0
    %1435 = vmatpush1.bf16.msra.mxu0 0
    %1436 = vmatprep.subr.bf16.mxu0 0
    %1437 = vmatpush1.bf16.msra.mxu0 0
    %1438 = vmatprep.subr.bf16.mxu0 0
    %1439 = vmatpush1.bf16.msra.mxu0 0
    %1440 = vmatprep.subr.bf16.mxu0 0
    %1441 = vmatpush1.bf16.msra.mxu0 0
    %1442 = vmatprep.subr.bf16.mxu0 0
    %1443 = vmatpush1.bf16.msra.mxu0 0
    %1444 = vmatprep.subr.bf16.mxu0 0
    %1445 = vmatpush1.bf16.msra.mxu0 0
    %1446 = vmatprep.subr.bf16.mxu0 0
    %1447 = vmatpush1.bf16.msra.mxu0 0
    %1448 = vmatprep.mubr.bf16.mxu0 0
    %1449 = vmatmul.mubr.bf16.gmra.mrb[0].mxu0 %v1411
    %v1450 = vpop.f32.mrb[0].mxu0
    %v1451 = vadd.f32 %v1397, %v1450
    %v1452 = vpop.f32.mrb[0].mxu0
    %v1453 = vpop.f32.mrb[0].mxu0
    %v1454 = vadd.f32 %v1397, %v1453
    %v1455 = vpop.f32.mrb[0].mxu0
    %1456 = vmatprep.mubr.bf16.mxu0 0
    %1457 = vmatmul.mubr.bf16.gmra.mrb[0].mxu0 %v1414
    %v1458 = vpop.f32.mrb[0].mxu0
    %v1459 = vadd.f32 %v1397, %v1458
    %v1460 = vpop.f32.mrb[0].mxu0
    %v1461 = vpop.f32.mrb[0].mxu0
    %v1462 = vadd.f32 %v1397, %v1461
    %v1463 = vpop.f32.mrb[0].mxu0
    %1464 = vdwg.mxu0
    %v1465 = vmul.f32 %v1451, %v19
    %v1466 = vmul.f32 %v1454, %v20
    %v1467 = vmul.f32 %v1459, %v21
    %v1468 = vmul.f32 %v1462, %v22
    %v1469 = vmul.f32 %v1451, %v23
    %v1470 = vmul.f32 %v1454, %v24
    %v1471 = vmul.f32 %v1459, %v25
    %v1472 = vmul.f32 %v1462, %v26
    %v1473 = vmul.f32 %v1451, %v27
    %v1474 = vmul.f32 %v1454, %v28
    %v1475 = vmul.f32 %v1459, %v29
    %v1476 = vmul.f32 %v1462, %v30
    %v1477 = vmul.f32 %v1451, %v31
    %v1478 = vmul.f32 %v1454, %v32
    %v1479 = vmul.f32 %v1459, %v33
    %v1480 = vmul.f32 %v1462, %v34
    %1485 = vrot.lane.b32.xlu0 %v1451, 96
    %v1486 = vpop.permute.xlu0 %1485
    %1487 = vrot.lane.b32.xlu0 %v1454, 96
    %v1488 = vpop.permute.xlu0 %1487
    %1489 = vrot.lane.b32.xlu0 %v1459, 96
    %v1490 = vpop.permute.xlu0 %1489
    %1491 = vrot.lane.b32.xlu0 %v1462, 96
    %v1492 = vpop.permute.xlu0 %1491
    %v1494 = vsel %vm142, %v1465, 0
    %v1497 = vsel %vm142, %v1466, 0
    %v1500 = vsel %vm142, %v1467, 0
    %v1503 = vsel %vm142, %v1468, 0
    %v1506 = vsel %vm142, %v1469, 0
    %v1509 = vsel %vm142, %v1470, 0
    %v1512 = vsel %vm142, %v1471, 0
    %v1515 = vsel %vm142, %v1472, 0
    %v1518 = vsel %vm142, %v1473, 0
    %v1521 = vsel %vm142, %v1474, 0
    %v1524 = vsel %vm142, %v1475, 0
    %v1527 = vsel %vm142, %v1476, 0
    %v1530 = vsel %vm142, %v1477, 0
    %v1533 = vsel %vm142, %v1478, 0
    %v1536 = vsel %vm142, %v1479, 0
    %v1539 = vsel %vm142, %v1480, 0
    %v1541 = vsel %vm142, %v1486, 0
    %v1543 = vsel %vm142, %v1488, 0
    %v1545 = vsel %vm142, %v1490, 0
    %v1547 = vsel %vm142, %v1492, 0
    %1549 = vmatprep.subr.mxu0 0.0
    %1550 = vmatpush1.xpose.msra.mxu0 %v1541
    %1551 = vmatprep.subr.mxu0 0.0
    %1552 = vmatpush1.xpose.msra.mxu0 %v1543
    %1553 = vmatprep.subr.mxu0 0.0
    %1554 = vmatpush1.xpose.msra.mxu0 %v1545
    %1555 = vmatprep.subr.mxu0 0.0
    %1556 = vmatpush1.xpose.msra.mxu0 %v1547
    %1557 = vmatprep.subr.mxu0 0.0
    %1558 = vmatpush1.xpose.msra.mxu0 0.0
    %1559 = vmatprep.subr.mxu0 0.0
    %1560 = vmatpush1.xpose.msra.mxu0 0.0
    %1561 = vmatprep.subr.mxu0 0.0
    %1562 = vmatpush1.xpose.msra.mxu0 0.0
    %1563 = vmatprep.subr.mxu0 0.0
    %1564 = vmatpush1.xpose.msra.mxu0 0.0
    %1565 = vmatprep.subr.mxu0 0.0
    %1566 = vmatpush1.xpose.msra.mxu0 0.0
    %1567 = vmatprep.subr.mxu0 0.0
    %1568 = vmatpush1.xpose.msra.mxu0 0.0
    %1569 = vmatprep.subr.mxu0 0.0
    %1570 = vmatpush1.xpose.msra.mxu0 0.0
    %1571 = vmatprep.subr.mxu0 0.0
    %1572 = vmatpush1.xpose.msra.mxu0 0.0
    %1573 = vmatprep.subr.mxu0 0.0
    %1574 = vmatpush1.xpose.msra.mxu0 0.0
    %1575 = vmatprep.subr.mxu0 0.0
    %1576 = vmatpush1.xpose.msra.mxu0 0.0
    %1577 = vmatprep.subr.mxu0 0.0
    %1578 = vmatpush1.xpose.msra.mxu0 0.0
    %1579 = vmatprep.subr.mxu0 0.0
    %1580 = vmatpush1.xpose.msra.mxu0 0.0
    %1581 = vmatprep.subr.mxu0 0.0
    %1582 = vmatpush1.xpose.msra.mxu0 0.0
    %1583 = vmatprep.subr.mxu0 0.0
    %1584 = vmatpush1.xpose.msra.mxu0 0.0
    %1585 = vmatprep.subr.mxu0 0.0
    %1586 = vmatpush1.xpose.msra.mxu0 0.0
    %1587 = vmatprep.subr.mxu0 0.0
    %1588 = vmatpush1.xpose.msra.mxu0 0.0
    %1589 = vmatprep.subr.mxu0 0.0
    %1590 = vmatpush1.xpose.msra.mxu0 0.0
    %1591 = vmatprep.subr.mxu0 0.0
    %1592 = vmatpush1.xpose.msra.mxu0 0.0
    %1593 = vmatprep.subr.mxu0 0.0
    %1594 = vmatpush1.xpose.msra.mxu0 0.0
    %1595 = vmatprep.subr.mxu0 0.0
    %1596 = vmatpush1.xpose.msra.mxu0 0.0
    %1597 = vmatprep.subr.mxu0 0.0
    %1598 = vmatpush1.xpose.msra.mxu0 0.0
    %1599 = vmatprep.subr.mxu0 0.0
    %1600 = vmatpush1.xpose.msra.mxu0 0.0
    %1601 = vmatprep.subr.mxu0 0.0
    %1602 = vmatpush1.xpose.msra.mxu0 0.0
    %1603 = vmatprep.subr.mxu0 0.0
    %1604 = vmatpush1.xpose.msra.mxu0 0.0
    %1605 = vmatprep.subr.mxu0 0.0
    %1606 = vmatpush1.xpose.msra.mxu0 0.0
    %1607 = vmatprep.subr.mxu0 0.0
    %1608 = vmatpush1.xpose.msra.mxu0 0.0
    %1609 = vmatprep.subr.mxu0 0.0
    %1610 = vmatpush1.xpose.msra.mxu0 0.0
    %1611 = vmatprep.subr.mxu0 0.0
    %1612 = vmatpush1.xpose.msra.mxu0 0.0
    %1613 = vmatprep.mubr.f32.mxu0 0.0
    %1614 = vmatmul.mubr.f32.gmra.mrb[0].mxu0 %v1494
    %v1615 = vpop.f32.mrb[0].mxu0
    %v1616 = vadd.f32 %v35, %v1615
    %v1617 = vpop.f32.mrb[0].mxu0
    %1618 = vmatprep.mubr.f32.mxu0 0.0
    %1619 = vmatmul.mubr.f32.gmra.mrb[0].mxu0 %v1497
    %v1620 = vpop.f32.mrb[0].mxu0
    %v1621 = vadd.f32 %v36, %v1620
    %v1622 = vpop.f32.mrb[0].mxu0
    %1623 = vmatprep.mubr.f32.mxu0 0.0
    %1624 = vmatmul.mubr.f32.gmra.mrb[0].mxu0 %v1500
    %v1625 = vpop.f32.mrb[0].mxu0
    %v1626 = vadd.f32 %v37, %v1625
    %v1627 = vpop.f32.mrb[0].mxu0
    %1628 = vmatprep.mubr.f32.mxu0 0.0
    %1629 = vmatmul.mubr.f32.gmra.mrb[0].mxu0 %v1503
    %v1630 = vpop.f32.mrb[0].mxu0
    %v1631 = vadd.f32 %v38, %v1630
    %v1632 = vpop.f32.mrb[0].mxu0
    %1633 = vmatprep.mubr.f32.mxu0 0.0
    %1634 = vmatmul.mubr.f32.gmra.mrb[0].mxu0 %v1506
    %v1635 = vpop.f32.mrb[0].mxu0
    %v1636 = vadd.f32 %v39, %v1635
    %v1637 = vpop.f32.mrb[0].mxu0
    %1638 = vmatprep.mubr.f32.mxu0 0.0
    %1639 = vmatmul.mubr.f32.gmra.mrb[0].mxu0 %v1509
    %v1640 = vpop.f32.mrb[0].mxu0
    %v1641 = vadd.f32 %v40, %v1640
    %v1642 = vpop.f32.mrb[0].mxu0
    %1643 = vmatprep.mubr.f32.mxu0 0.0
    %1644 = vmatmul.mubr.f32.gmra.mrb[0].mxu0 %v1512
    %v1645 = vpop.f32.mrb[0].mxu0
    %v1646 = vadd.f32 %v41, %v1645
    %v1647 = vpop.f32.mrb[0].mxu0
    %1648 = vmatprep.mubr.f32.mxu0 0.0
    %1649 = vmatmul.mubr.f32.gmra.mrb[0].mxu0 %v1515
    %v1650 = vpop.f32.mrb[0].mxu0
    %v1651 = vadd.f32 %v42, %v1650
    %v1652 = vpop.f32.mrb[0].mxu0
    %1653 = vmatprep.mubr.f32.mxu0 0.0
    %1654 = vmatmul.mubr.f32.gmra.mrb[0].mxu0 %v1518
    %v1655 = vpop.f32.mrb[0].mxu0
    %v1656 = vadd.f32 %v43, %v1655
    %v1657 = vpop.f32.mrb[0].mxu0
    %1658 = vmatprep.mubr.f32.mxu0 0.0
    %1659 = vmatmul.mubr.f32.gmra.mrb[0].mxu0 %v1521
    %v1660 = vpop.f32.mrb[0].mxu0
    %v1661 = vadd.f32 %v44, %v1660
    %v1662 = vpop.f32.mrb[0].mxu0
    %1663 = vmatprep.mubr.f32.mxu0 0.0
    %1664 = vmatmul.mubr.f32.gmra.mrb[0].mxu0 %v1524
    %v1665 = vpop.f32.mrb[0].mxu0
    %v1666 = vadd.f32 %v45, %v1665
    %v1667 = vpop.f32.mrb[0].mxu0
    %1668 = vmatprep.mubr.f32.mxu0 0.0
    %1669 = vmatmul.mubr.f32.gmra.mrb[0].mxu0 %v1527
    %v1670 = vpop.f32.mrb[0].mxu0
    %v1671 = vadd.f32 %v46, %v1670
    %v1672 = vpop.f32.mrb[0].mxu0
    %1673 = vmatprep.mubr.f32.mxu0 0.0
    %1674 = vmatmul.mubr.f32.gmra.mrb[0].mxu0 %v1530
    %v1675 = vpop.f32.mrb[0].mxu0
    %v1676 = vadd.f32 %v47, %v1675
    %v1677 = vpop.f32.mrb[0].mxu0
    %1678 = vmatprep.mubr.f32.mxu0 0.0
    %1679 = vmatmul.mubr.f32.gmra.mrb[0].mxu0 %v1533
    %v1680 = vpop.f32.mrb[0].mxu0
    %v1681 = vadd.f32 %v48, %v1680
    %v1682 = vpop.f32.mrb[0].mxu0
    %1683 = vmatprep.mubr.f32.mxu0 0.0
    %1684 = vmatmul.mubr.f32.gmra.mrb[0].mxu0 %v1536
    %v1685 = vpop.f32.mrb[0].mxu0
    %v1686 = vadd.f32 %v49, %v1685
    %v1687 = vpop.f32.mrb[0].mxu0
    %1688 = vmatprep.mubr.f32.mxu0 0.0
    %1689 = vmatmul.mubr.f32.gmra.mrb[0].mxu0 %v1539
    %v1690 = vpop.f32.mrb[0].mxu0
    %v1691 = vadd.f32 %v50, %v1690
    %v1692 = vpop.f32.mrb[0].mxu0
    %1693 = vdwg.mxu0
    %v1694 = vsel %vm142, %v1616, -inf
    %1695 = vmax.xlane.f32.xlu0 %v1694
    %v1696 = vpop.xlane.xlu0 %1695
    %v1697 = vsel %vm142, %v1621, -inf
    %1698 = vmax.xlane.f32.xlu0 %v1697
    %v1699 = vpop.xlane.xlu0 %1698
    %v1700 = vsel %vm142, %v1626, -inf
    %1701 = vmax.xlane.f32.xlu0 %v1700
    %v1702 = vpop.xlane.xlu0 %1701
    %v1703 = vsel %vm142, %v1631, -inf
    %1704 = vmax.xlane.f32.xlu0 %v1703
    %v1705 = vpop.xlane.xlu0 %1704
    %v1706 = vsel %vm142, %v1636, -inf
    %1707 = vmax.xlane.f32.xlu0 %v1706
    %v1708 = vpop.xlane.xlu0 %1707
    %v1709 = vsel %vm142, %v1641, -inf
    %1710 = vmax.xlane.f32.xlu0 %v1709
    %v1711 = vpop.xlane.xlu0 %1710
    %v1712 = vsel %vm142, %v1646, -inf
    %1713 = vmax.xlane.f32.xlu0 %v1712
    %v1714 = vpop.xlane.xlu0 %1713
    %v1715 = vsel %vm142, %v1651, -inf
    %1716 = vmax.xlane.f32.xlu0 %v1715
    %v1717 = vpop.xlane.xlu0 %1716
    %v1718 = vsel %vm142, %v1656, -inf
    %1719 = vmax.xlane.f32.xlu0 %v1718
    %v1720 = vpop.xlane.xlu0 %1719
    %v1721 = vsel %vm142, %v1661, -inf
    %1722 = vmax.xlane.f32.xlu0 %v1721
    %v1723 = vpop.xlane.xlu0 %1722
    %v1724 = vsel %vm142, %v1666, -inf
    %1725 = vmax.xlane.f32.xlu0 %v1724
    %v1726 = vpop.xlane.xlu0 %1725
    %v1727 = vsel %vm142, %v1671, -inf
    %1728 = vmax.xlane.f32.xlu0 %v1727
    %v1729 = vpop.xlane.xlu0 %1728
    %v1730 = vsel %vm142, %v1676, -inf
    %1731 = vmax.xlane.f32.xlu0 %v1730
    %v1732 = vpop.xlane.xlu0 %1731
    %v1733 = vsel %vm142, %v1681, -inf
    %1734 = vmax.xlane.f32.xlu0 %v1733
    %v1735 = vpop.xlane.xlu0 %1734
    %v1736 = vsel %vm142, %v1686, -inf
    %1737 = vmax.xlane.f32.xlu0 %v1736
    %v1738 = vpop.xlane.xlu0 %1737
    %v1739 = vsel %vm142, %v1691, -inf
    %1740 = vmax.xlane.f32.xlu0 %v1739
    %v1741 = vpop.xlane.xlu0 %1740
    %v1742 = vsub.f32 %v1616, %v1696
    %v1743 = vsub.f32 %v1621, %v1699
    %v1744 = vsub.f32 %v1626, %v1702
    %v1745 = vsub.f32 %v1631, %v1705
    %v1746 = vsub.f32 %v1636, %v1708
    %v1747 = vsub.f32 %v1641, %v1711
    %v1748 = vsub.f32 %v1646, %v1714
    %v1749 = vsub.f32 %v1651, %v1717
    %v1750 = vsub.f32 %v1656, %v1720
    %v1751 = vsub.f32 %v1661, %v1723
    %v1752 = vsub.f32 %v1666, %v1726
    %v1753 = vsub.f32 %v1671, %v1729
    %v1754 = vsub.f32 %v1676, %v1732
    %v1755 = vsub.f32 %v1681, %v1735
    %v1756 = vsub.f32 %v1686, %v1738
    %v1757 = vsub.f32 %v1691, %v1741
    %v1758 = vmul.f32 %v1742, 1.442695
    %v1759 = vpow.pop %v1758
    %v1760 = vmul.f32 %v1743, 1.442695
    %v1761 = vpow.pop %v1760
    %v1762 = vmul.f32 %v1744, 1.442695
    %v1763 = vpow.pop %v1762
    %v1764 = vmul.f32 %v1745, 1.442695
    %v1765 = vpow.pop %v1764
    %v1766 = vmul.f32 %v1746, 1.442695
    %v1767 = vpow.pop %v1766
    %v1768 = vmul.f32 %v1747, 1.442695
    %v1769 = vpow.pop %v1768
    %v1770 = vmul.f32 %v1748, 1.442695
    %v1771 = vpow.pop %v1770
    %v1772 = vmul.f32 %v1749, 1.442695
    %v1773 = vpow.pop %v1772
    %v1774 = vmul.f32 %v1750, 1.442695
    %v1775 = vpow.pop %v1774
    %v1776 = vmul.f32 %v1751, 1.442695
    %v1777 = vpow.pop %v1776
    %v1778 = vmul.f32 %v1752, 1.442695
    %v1779 = vpow.pop %v1778
    %v1780 = vmul.f32 %v1753, 1.442695
    %v1781 = vpow.pop %v1780
    %v1782 = vmul.f32 %v1754, 1.442695
    %v1783 = vpow.pop %v1782
    %v1784 = vmul.f32 %v1755, 1.442695
    %v1785 = vpow.pop %v1784
    %v1786 = vmul.f32 %v1756, 1.442695
    %v1787 = vpow.pop %v1786
    %v1788 = vmul.f32 %v1757, 1.442695
    %v1789 = vpow.pop %v1788
    %v1790 = vsel %vm142, %v1759, 0.0
    %1791 = vadd.xlane.f32.xlu0 %v1790
    %v1792 = vpop.xlane.xlu0 %1791
    %v1793 = vsel %vm142, %v1761, 0.0
    %1794 = vadd.xlane.f32.xlu0 %v1793
    %v1795 = vpop.xlane.xlu0 %1794
    %v1796 = vsel %vm142, %v1763, 0.0
    %1797 = vadd.xlane.f32.xlu0 %v1796
    %v1798 = vpop.xlane.xlu0 %1797
    %v1799 = vsel %vm142, %v1765, 0.0
    %1800 = vadd.xlane.f32.xlu0 %v1799
    %v1801 = vpop.xlane.xlu0 %1800
    %v1802 = vsel %vm142, %v1767, 0.0
    %1803 = vadd.xlane.f32.xlu0 %v1802
    %v1804 = vpop.xlane.xlu0 %1803
    %v1805 = vsel %vm142, %v1769, 0.0
    %1806 = vadd.xlane.f32.xlu0 %v1805
    %v1807 = vpop.xlane.xlu0 %1806
    %v1808 = vsel %vm142, %v1771, 0.0
    %1809 = vadd.xlane.f32.xlu0 %v1808
    %v1810 = vpop.xlane.xlu0 %1809
    %v1811 = vsel %vm142, %v1773, 0.0
    %1812 = vadd.xlane.f32.xlu0 %v1811
    %v1813 = vpop.xlane.xlu0 %1812
    %v1814 = vsel %vm142, %v1775, 0.0
    %1815 = vadd.xlane.f32.xlu0 %v1814
    %v1816 = vpop.xlane.xlu0 %1815
    %v1817 = vsel %vm142, %v1777, 0.0
    %1818 = vadd.xlane.f32.xlu0 %v1817
    %v1819 = vpop.xlane.xlu0 %1818
    %v1820 = vsel %vm142, %v1779, 0.0
    %1821 = vadd.xlane.f32.xlu0 %v1820
    %v1822 = vpop.xlane.xlu0 %1821
    %v1823 = vsel %vm142, %v1781, 0.0
    %1824 = vadd.xlane.f32.xlu0 %v1823
    %v1825 = vpop.xlane.xlu0 %1824
    %v1826 = vsel %vm142, %v1783, 0.0
    %1827 = vadd.xlane.f32.xlu0 %v1826
    %v1828 = vpop.xlane.xlu0 %1827
    %v1829 = vsel %vm142, %v1785, 0.0
    %1830 = vadd.xlane.f32.xlu0 %v1829
    %v1831 = vpop.xlane.xlu0 %1830
    %v1832 = vsel %vm142, %v1787, 0.0
    %1833 = vadd.xlane.f32.xlu0 %v1832
    %v1834 = vpop.xlane.xlu0 %1833
    %v1835 = vsel %vm142, %v1789, 0.0
    %1836 = vadd.xlane.f32.xlu0 %v1835
    %v1837 = vpop.xlane.xlu0 %1836
    %v1838 = vrcp.pop %v1792
    %v1839 = vrcp.pop %v1795
    %v1840 = vrcp.pop %v1798
    %v1841 = vrcp.pop %v1801
    %v1842 = vrcp.pop %v1804
    %v1843 = vrcp.pop %v1807
    %v1844 = vrcp.pop %v1810
    %v1845 = vrcp.pop %v1813
    %v1846 = vrcp.pop %v1816
    %v1847 = vrcp.pop %v1819
    %v1848 = vrcp.pop %v1822
    %v1849 = vrcp.pop %v1825
    %v1850 = vrcp.pop %v1828
    %v1851 = vrcp.pop %v1831
    %v1852 = vrcp.pop %v1834
    %v1853 = vrcp.pop %v1837
    %v1854 = vmul.f32 %v1759, %v1838
    %v1855 = vmul.f32 %v1761, %v1839
    %v1856 = vmul.f32 %v1763, %v1840
    %v1857 = vmul.f32 %v1765, %v1841
    %v1858 = vmul.f32 %v1767, %v1842
    %v1859 = vmul.f32 %v1769, %v1843
    %v1860 = vmul.f32 %v1771, %v1844
    %v1861 = vmul.f32 %v1773, %v1845
    %v1862 = vmul.f32 %v1775, %v1846
    %v1863 = vmul.f32 %v1777, %v1847
    %v1864 = vmul.f32 %v1779, %v1848
    %v1865 = vmul.f32 %v1781, %v1849
    %v1866 = vmul.f32 %v1783, %v1850
    %v1867 = vmul.f32 %v1785, %v1851
    %v1868 = vmul.f32 %v1787, %v1852
    %v1869 = vmul.f32 %v1789, %v1853
    %1870 = vrot.lane.b32.xlu0 %v1451, 64
    %v1871 = vpop.permute.xlu0 %1870
    %1872 = vrot.lane.b32.xlu0 %v1454, 64
    %v1873 = vpop.permute.xlu0 %1872
    %1874 = vrot.lane.b32.xlu0 %v1459, 64
    %v1875 = vpop.permute.xlu0 %1874
    %1876 = vrot.lane.b32.xlu0 %v1462, 64
    %v1877 = vpop.permute.xlu0 %1876
    %v1883 = vsel %vm142, %v1854, 0
    %v1886 = vsel %vm142, %v1855, 0
    %v1889 = vsel %vm142, %v1856, 0
    %v1892 = vsel %vm142, %v1857, 0
    %v1895 = vsel %vm142, %v1858, 0
    %v1898 = vsel %vm142, %v1859, 0
    %v1901 = vsel %vm142, %v1860, 0
    %v1904 = vsel %vm142, %v1861, 0
    %v1907 = vsel %vm142, %v1862, 0
    %v1910 = vsel %vm142, %v1863, 0
    %v1913 = vsel %vm142, %v1864, 0
    %v1916 = vsel %vm142, %v1865, 0
    %v1919 = vsel %vm142, %v1866, 0
    %v1922 = vsel %vm142, %v1867, 0
    %v1925 = vsel %vm142, %v1868, 0
    %v1928 = vsel %vm142, %v1869, 0
    %1930 = vmatprep.subr.mxu0 0.0
    %1931 = vmatpush1.msra.mxu0 %v1871
    %1932 = vmatprep.subr.mxu0 0.0
    %1933 = vmatpush1.msra.mxu0 %v1873
    %1934 = vmatprep.subr.mxu0 0.0
    %1935 = vmatpush1.msra.mxu0 %v1875
    %1936 = vmatprep.subr.mxu0 0.0
    %1937 = vmatpush1.msra.mxu0 %v1877
    %1938 = vmatprep.subr.mxu0 0.0
    %1939 = vmatpush1.msra.mxu0 0.0
    %1940 = vmatprep.subr.mxu0 0.0
    %1941 = vmatpush1.msra.mxu0 0.0
    %1942 = vmatprep.subr.mxu0 0.0
    %1943 = vmatpush1.msra.mxu0 0.0
    %1944 = vmatprep.subr.mxu0 0.0
    %1945 = vmatpush1.msra.mxu0 0.0
    %1946 = vmatprep.subr.mxu0 0.0
    %1947 = vmatpush1.msra.mxu0 0.0
    %1948 = vmatprep.subr.mxu0 0.0
    %1949 = vmatpush1.msra.mxu0 0.0
    %1950 = vmatprep.subr.mxu0 0.0
    %1951 = vmatpush1.msra.mxu0 0.0
    %1952 = vmatprep.subr.mxu0 0.0
    %1953 = vmatpush1.msra.mxu0 0.0
    %1954 = vmatprep.subr.mxu0 0.0
    %1955 = vmatpush1.msra.mxu0 0.0
    %1956 = vmatprep.subr.mxu0 0.0
    %1957 = vmatpush1.msra.mxu0 0.0
    %1958 = vmatprep.subr.mxu0 0.0
    %1959 = vmatpush1.msra.mxu0 0.0
    %1960 = vmatprep.subr.mxu0 0.0
    %1961 = vmatpush1.msra.mxu0 0.0
    %1962 = vmatprep.subr.mxu0 0.0
    %1963 = vmatpush1.msra.mxu0 0.0
    %1964 = vmatprep.subr.mxu0 0.0
    %1965 = vmatpush1.msra.mxu0 0.0
    %1966 = vmatprep.subr.mxu0 0.0
    %1967 = vmatpush1.msra.mxu0 0.0
    %1968 = vmatprep.subr.mxu0 0.0
    %1969 = vmatpush1.msra.mxu0 0.0
    %1970 = vmatprep.subr.mxu0 0.0
    %1971 = vmatpush1.msra.mxu0 0.0
    %1972 = vmatprep.subr.mxu0 0.0
    %1973 = vmatpush1.msra.mxu0 0.0
    %1974 = vmatprep.subr.mxu0 0.0
    %1975 = vmatpush1.msra.mxu0 0.0
    %1976 = vmatprep.subr.mxu0 0.0
    %1977 = vmatpush1.msra.mxu0 0.0
    %1978 = vmatprep.subr.mxu0 0.0
    %1979 = vmatpush1.msra.mxu0 0.0
    %1980 = vmatprep.subr.mxu0 0.0
    %1981 = vmatpush1.msra.mxu0 0.0
    %1982 = vmatprep.subr.mxu0 0.0
    %1983 = vmatpush1.msra.mxu0 0.0
    %1984 = vmatprep.subr.mxu0 0.0
    %1985 = vmatpush1.msra.mxu0 0.0
    %1986 = vmatprep.subr.mxu0 0.0
    %1987 = vmatpush1.msra.mxu0 0.0
    %1988 = vmatprep.subr.mxu0 0.0
    %1989 = vmatpush1.msra.mxu0 0.0
    %1990 = vmatprep.subr.mxu0 0.0
    %1991 = vmatpush1.msra.mxu0 0.0
    %1992 = vmatprep.subr.mxu0 0.0
    %1993 = vmatpush1.msra.mxu0 0.0
    %1994 = vmatprep.mubr.f32.mxu0 0.0
    %1995 = vmatmul.mubr.f32.gmra.mrb[0].mxu0 %v1883
    %v1996 = vpop.f32.mrb[0].mxu0
    %v1997 = vadd.f32 0.0, %v1996
    %v1998 = vpop.f32.mrb[0].mxu0
    %1999 = vmatprep.mubr.f32.mxu0 0.0
    %2000 = vmatmul.mubr.f32.gmra.mrb[0].mxu0 %v1886
    %v2001 = vpop.f32.mrb[0].mxu0
    %v2002 = vadd.f32 0.0, %v2001
    %v2003 = vpop.f32.mrb[0].mxu0
    %2004 = vmatprep.mubr.f32.mxu0 0.0
    %2005 = vmatmul.mubr.f32.gmra.mrb[0].mxu0 %v1889
    %v2006 = vpop.f32.mrb[0].mxu0
    %v2007 = vadd.f32 0.0, %v2006
    %v2008 = vpop.f32.mrb[0].mxu0
    %2009 = vmatprep.mubr.f32.mxu0 0.0
    %2010 = vmatmul.mubr.f32.gmra.mrb[0].mxu0 %v1892
    %v2011 = vpop.f32.mrb[0].mxu0
    %v2012 = vadd.f32 0.0, %v2011
    %v2013 = vpop.f32.mrb[0].mxu0
    %2014 = vmatprep.mubr.f32.mxu0 0.0
    %2015 = vmatmul.mubr.f32.gmra.mrb[0].mxu0 %v1895
    %v2016 = vpop.f32.mrb[0].mxu0
    %v2017 = vadd.f32 0.0, %v2016
    %v2018 = vpop.f32.mrb[0].mxu0
    %2019 = vmatprep.mubr.f32.mxu0 0.0
    %2020 = vmatmul.mubr.f32.gmra.mrb[0].mxu0 %v1898
    %v2021 = vpop.f32.mrb[0].mxu0
    %v2022 = vadd.f32 0.0, %v2021
    %v2023 = vpop.f32.mrb[0].mxu0
    %2024 = vmatprep.mubr.f32.mxu0 0.0
    %2025 = vmatmul.mubr.f32.gmra.mrb[0].mxu0 %v1901
    %v2026 = vpop.f32.mrb[0].mxu0
    %v2027 = vadd.f32 0.0, %v2026
    %v2028 = vpop.f32.mrb[0].mxu0
    %2029 = vmatprep.mubr.f32.mxu0 0.0
    %2030 = vmatmul.mubr.f32.gmra.mrb[0].mxu0 %v1904
    %v2031 = vpop.f32.mrb[0].mxu0
    %v2032 = vadd.f32 0.0, %v2031
    %v2033 = vpop.f32.mrb[0].mxu0
    %2034 = vmatprep.mubr.f32.mxu0 0.0
    %2035 = vmatmul.mubr.f32.gmra.mrb[0].mxu0 %v1907
    %v2036 = vpop.f32.mrb[0].mxu0
    %v2037 = vadd.f32 0.0, %v2036
    %v2038 = vpop.f32.mrb[0].mxu0
    %2039 = vmatprep.mubr.f32.mxu0 0.0
    %2040 = vmatmul.mubr.f32.gmra.mrb[0].mxu0 %v1910
    %v2041 = vpop.f32.mrb[0].mxu0
    %v2042 = vadd.f32 0.0, %v2041
    %v2043 = vpop.f32.mrb[0].mxu0
    %2044 = vmatprep.mubr.f32.mxu0 0.0
    %2045 = vmatmul.mubr.f32.gmra.mrb[0].mxu0 %v1913
    %v2046 = vpop.f32.mrb[0].mxu0
    %v2047 = vadd.f32 0.0, %v2046
    %v2048 = vpop.f32.mrb[0].mxu0
    %2049 = vmatprep.mubr.f32.mxu0 0.0
    %2050 = vmatmul.mubr.f32.gmra.mrb[0].mxu0 %v1916
    %v2051 = vpop.f32.mrb[0].mxu0
    %v2052 = vadd.f32 0.0, %v2051
    %v2053 = vpop.f32.mrb[0].mxu0
    %2054 = vmatprep.mubr.f32.mxu0 0.0
    %2055 = vmatmul.mubr.f32.gmra.mrb[0].mxu0 %v1919
    %v2056 = vpop.f32.mrb[0].mxu0
    %v2057 = vadd.f32 0.0, %v2056
    %v2058 = vpop.f32.mrb[0].mxu0
    %2059 = vmatprep.mubr.f32.mxu0 0.0
    %2060 = vmatmul.mubr.f32.gmra.mrb[0].mxu0 %v1922
    %v2061 = vpop.f32.mrb[0].mxu0
    %v2062 = vadd.f32 0.0, %v2061
    %v2063 = vpop.f32.mrb[0].mxu0
    %2064 = vmatprep.mubr.f32.mxu0 0.0
    %2065 = vmatmul.mubr.f32.gmra.mrb[0].mxu0 %v1925
    %v2066 = vpop.f32.mrb[0].mxu0
    %v2067 = vadd.f32 0.0, %v2066
    %v2068 = vpop.f32.mrb[0].mxu0
    %2069 = vmatprep.mubr.f32.mxu0 0.0
    %2070 = vmatmul.mubr.f32.gmra.mrb[0].mxu0 %v1928
    %v2071 = vpop.f32.mrb[0].mxu0
    %v2072 = vadd.f32 0.0, %v2071
    %v2073 = vpop.f32.mrb[0].mxu0
    %2074 = vdwg.mxu0
    %v2075 = vmul.f32 %v1997, %v902
    %v2076 = vmul.f32 %v2002, %v902
    %v2077 = vmul.f32 %v2007, %v902
    %v2078 = vmul.f32 %v2012, %v902
    %v2079 = vmul.f32 %v2017, %v910
    %v2080 = vmul.f32 %v2022, %v910
    %v2081 = vmul.f32 %v2027, %v910
    %v2082 = vmul.f32 %v2032, %v910
    %v2083 = vadd.f32 %v2075, %v2079
    %v2084 = vadd.f32 %v2076, %v2080
    %v2085 = vadd.f32 %v2077, %v2081
    %v2086 = vadd.f32 %v2078, %v2082
    %v2087 = vmul.f32 %v2037, %v922
    %v2088 = vmul.f32 %v2042, %v922
    %v2089 = vmul.f32 %v2047, %v922
    %v2090 = vmul.f32 %v2052, %v922
    %v2091 = vadd.f32 %v2083, %v2087
    %v2092 = vadd.f32 %v2084, %v2088
    %v2093 = vadd.f32 %v2085, %v2089
    %v2094 = vadd.f32 %v2086, %v2090
    %v2095 = vmul.f32 %v2057, %v934
    %v2096 = vmul.f32 %v2062, %v934
    %v2097 = vmul.f32 %v2067, %v934
    %v2098 = vmul.f32 %v2072, %v934
    %v2099 = vadd.f32 %v2091, %v2095
    %v2100 = vadd.f32 %v2092, %v2096
    %v2101 = vadd.f32 %v2093, %v2097
    %v2102 = vadd.f32 %v2094, %v2098
    %v2103 = vld [vmem:[%s1 + $0x98] sm:$0xf]
    %v2104 = vld [vmem:[%s1 + $0x9c] sm:$0xf]
    %v2105 = vld [vmem:[%s1 + $0xa0] sm:$0xf]
    %v2106 = vld [vmem:[%s1 + $0xa4] sm:$0xf]
    %v2107 = vpack.c.bf16 %v2100, %v2099
    %v2108 = vpack.c.bf16 %v2102, %v2101
    %v2113 = vunpack.c.l.b16 %v2103
    %v2114 = vunpack.c.l.b16 %v2104
    %v2115 = vunpack.c.l.b16 %v2105
    %v2116 = vunpack.c.l.b16 %v2106
    %v2117 = vpack.c.b16 %v2114, %v2113
    %v2118 = vpack.c.b16 %v2116, %v2115
    %v2122 = vsel %vm142, %v2107, 0
    %v2125 = vsel %vm142, %v2108, 0
    %2127 = vmatprep.subr.bf16.mxu0 0
    %2128 = vmatpush1.bf16.msra.mxu0 %v2117
    %2129 = vmatprep.subr.bf16.mxu0 0
    %2130 = vmatpush1.bf16.msra.mxu0 %v2118
    %2131 = vmatprep.subr.bf16.mxu0 0
    %2132 = vmatpush1.bf16.msra.mxu0 0
    %2133 = vmatprep.subr.bf16.mxu0 0
    %2134 = vmatpush1.bf16.msra.mxu0 0
    %2135 = vmatprep.subr.bf16.mxu0 0
    %2136 = vmatpush1.bf16.msra.mxu0 0
    %2137 = vmatprep.subr.bf16.mxu0 0
    %2138 = vmatpush1.bf16.msra.mxu0 0
    %2139 = vmatprep.subr.bf16.mxu0 0
    %2140 = vmatpush1.bf16.msra.mxu0 0
    %2141 = vmatprep.subr.bf16.mxu0 0
    %2142 = vmatpush1.bf16.msra.mxu0 0
    %2143 = vmatprep.subr.bf16.mxu0 0
    %2144 = vmatpush1.bf16.msra.mxu0 0
    %2145 = vmatprep.subr.bf16.mxu0 0
    %2146 = vmatpush1.bf16.msra.mxu0 0
    %2147 = vmatprep.subr.bf16.mxu0 0
    %2148 = vmatpush1.bf16.msra.mxu0 0
    %2149 = vmatprep.subr.bf16.mxu0 0
    %2150 = vmatpush1.bf16.msra.mxu0 0
    %2151 = vmatprep.subr.bf16.mxu0 0
    %2152 = vmatpush1.bf16.msra.mxu0 0
    %2153 = vmatprep.subr.bf16.mxu0 0
    %2154 = vmatpush1.bf16.msra.mxu0 0
    %2155 = vmatprep.subr.bf16.mxu0 0
    %2156 = vmatpush1.bf16.msra.mxu0 0
    %2157 = vmatprep.subr.bf16.mxu0 0
    %2158 = vmatpush1.bf16.msra.mxu0 0
    %2159 = vmatprep.mubr.bf16.mxu0 0
    %2160 = vmatmul.mubr.bf16.gmra.mrb[0].mxu0 %v2122
    %v2161 = vpop.f32.mrb[0].mxu0
    %v2162 = vadd.f32 0.0, %v2161
    %v2163 = vpop.f32.mrb[0].mxu0
    %v2164 = vpop.f32.mrb[0].mxu0
    %v2165 = vadd.f32 0.0, %v2164
    %v2166 = vpop.f32.mrb[0].mxu0
    %2167 = vmatprep.mubr.bf16.mxu0 0
    %2168 = vmatmul.mubr.bf16.gmra.mrb[0].mxu0 %v2125
    %v2169 = vpop.f32.mrb[0].mxu0
    %v2170 = vadd.f32 0.0, %v2169
    %v2171 = vpop.f32.mrb[0].mxu0
    %v2172 = vpop.f32.mrb[0].mxu0
    %v2173 = vadd.f32 0.0, %v2172
    %v2174 = vpop.f32.mrb[0].mxu0
    %2175 = vdwg.mxu0
    %v2176 = vadd.f32 %v1316, %v2162
    %v2177 = vadd.f32 %v1317, %v2165
    %v2178 = vadd.f32 %v1318, %v2170
    %v2179 = vadd.f32 %v1319, %v2173
    %v2180 = vlaneseq
    %v2181 = vshrl.u32 %v2180, 7
    %v2182 = vsub.s32 4, %v2181
    %v2183 = vrot.slane %v17, %v2182
    %v2184 = vadd.f32 %v2176, %v2183
    %v2185 = vadd.f32 %v2177, %v2183
    %v2186 = vadd.f32 %v2178, %v2183
    %v2187 = vadd.f32 %v2179, %v2183
    %v2188 = vsel %vm142, %v2184, 0.0
    %2189 = vadd.xlane.f32.xlu0 %v2188
    %v2190 = vpop.xlane.xlu0 %2189
    %v2191 = vsel %vm142, %v2185, 0.0
    %2192 = vadd.xlane.f32.xlu0 %v2191
    %v2193 = vpop.xlane.xlu0 %2192
    %v2194 = vsel %vm142, %v2186, 0.0
    %2195 = vadd.xlane.f32.xlu0 %v2194
    %v2196 = vpop.xlane.xlu0 %2195
    %v2197 = vsel %vm142, %v2187, 0.0
    %2198 = vadd.xlane.f32.xlu0 %v2197
    %v2199 = vpop.xlane.xlu0 %2198
    %v2200 = vmul.f32 %v2190, %v155
    %v2201 = vmul.f32 %v2193, %v155
    %v2202 = vmul.f32 %v2196, %v155
    %v2203 = vmul.f32 %v2199, %v155
    %v2204 = vsub.f32 %v2184, %v2200
    %v2205 = vsub.f32 %v2185, %v2201
    %v2206 = vsub.f32 %v2186, %v2202
    %v2207 = vsub.f32 %v2187, %v2203
    %v2208 = vmul.f32 %v2204, %v2204
    %v2209 = vmul.f32 %v2205, %v2205
    %v2210 = vmul.f32 %v2206, %v2206
    %v2211 = vmul.f32 %v2207, %v2207
    %v2212 = vsel %vm142, %v2208, 0.0
    %2213 = vadd.xlane.f32.xlu0 %v2212
    %v2214 = vpop.xlane.xlu0 %2213
    %v2215 = vsel %vm142, %v2209, 0.0
    %2216 = vadd.xlane.f32.xlu0 %v2215
    %v2217 = vpop.xlane.xlu0 %2216
    %v2218 = vsel %vm142, %v2210, 0.0
    %2219 = vadd.xlane.f32.xlu0 %v2218
    %v2220 = vpop.xlane.xlu0 %2219
    %v2221 = vsel %vm142, %v2211, 0.0
    %2222 = vadd.xlane.f32.xlu0 %v2221
    %v2223 = vpop.xlane.xlu0 %2222
    %v2224 = vmul.f32 %v2214, %v155
    %v2225 = vmul.f32 %v2217, %v155
    %v2226 = vmul.f32 %v2220, %v155
    %v2227 = vmul.f32 %v2223, %v155
    %v2228 = vadd.f32 %v2224, 1e-06
    %v2229 = vadd.f32 %v2225, 1e-06
    %v2230 = vadd.f32 %v2226, 1e-06
    %v2231 = vadd.f32 %v2227, 1e-06
    %v2232 = vrsqrt.pop %v2228
    %v2233 = vrsqrt.pop %v2229
    %v2234 = vrsqrt.pop %v2230
    %v2235 = vrsqrt.pop %v2231
    %v2236 = vmul.f32 %v2204, %v2232
    %v2237 = vmul.f32 %v2205, %v2233
    %v2238 = vmul.f32 %v2206, %v2234
    %v2239 = vmul.f32 %v2207, %v2235
    %v2240 = vlaneseq
    %v2241 = vshrl.u32 %v2240, 7
    %v2242 = vsub.s32 5, %v2241
    %v2243 = vrot.slane %v17, %v2242
    %v2244 = vmul.f32 %v2236, %v2243
    %v2245 = vmul.f32 %v2237, %v2243
    %v2246 = vmul.f32 %v2238, %v2243
    %v2247 = vmul.f32 %v2239, %v2243
    %v2248 = vlaneseq
    %v2249 = vshrl.u32 %v2248, 7
    %v2250 = vsub.s32 6, %v2249
    %v2251 = vrot.slane %v17, %v2250
    %v2252 = vadd.f32 %v2244, %v2251
    %v2253 = vadd.f32 %v2245, %v2251
    %v2254 = vadd.f32 %v2246, %v2251
    %v2255 = vadd.f32 %v2247, %v2251
    %v2256 = vld [vmem:[%s1 + $0xa8] sm:$0xf]
    %v2257 = vld [vmem:[%s1 + $0xac] sm:$0xf]
    %v2258 = vld [vmem:[%s1 + $0xb0] sm:$0xf]
    %v2259 = vld [vmem:[%s1 + $0xb4] sm:$0xf]
    %v2260 = vpack.c.bf16 %v2253, %v2252
    %v2261 = vpack.c.bf16 %v2255, %v2254
    %v2262 = vlaneseq
    %v2263 = vshrl.u32 %v2262, 7
    %v2264 = vsub.s32 7, %v2263
    %v2265 = vrot.slane %v17, %v2264
    %v2270 = vunpack.c.l.b16 %v2256
    %v2271 = vunpack.c.l.b16 %v2257
    %v2272 = vunpack.c.l.b16 %v2258
    %v2273 = vunpack.c.l.b16 %v2259
    %v2274 = vpack.c.b16 %v2271, %v2270
    %v2275 = vpack.c.b16 %v2273, %v2272
    %v2279 = vsel %vm142, %v2260, 0
    %v2282 = vsel %vm142, %v2261, 0
    %2284 = vmatprep.subr.bf16.mxu0 0
    %2285 = vmatpush1.bf16.msra.mxu0 %v2274
    %2286 = vmatprep.subr.bf16.mxu0 0
    %2287 = vmatpush1.bf16.msra.mxu0 %v2275
    %2288 = vmatprep.subr.bf16.mxu0 0
    %2289 = vmatpush1.bf16.msra.mxu0 0
    %2290 = vmatprep.subr.bf16.mxu0 0
    %2291 = vmatpush1.bf16.msra.mxu0 0
    %2292 = vmatprep.subr.bf16.mxu0 0
    %2293 = vmatpush1.bf16.msra.mxu0 0
    %2294 = vmatprep.subr.bf16.mxu0 0
    %2295 = vmatpush1.bf16.msra.mxu0 0
    %2296 = vmatprep.subr.bf16.mxu0 0
    %2297 = vmatpush1.bf16.msra.mxu0 0
    %2298 = vmatprep.subr.bf16.mxu0 0
    %2299 = vmatpush1.bf16.msra.mxu0 0
    %2300 = vmatprep.subr.bf16.mxu0 0
    %2301 = vmatpush1.bf16.msra.mxu0 0
    %2302 = vmatprep.subr.bf16.mxu0 0
    %2303 = vmatpush1.bf16.msra.mxu0 0
    %2304 = vmatprep.subr.bf16.mxu0 0
    %2305 = vmatpush1.bf16.msra.mxu0 0
    %2306 = vmatprep.subr.bf16.mxu0 0
    %2307 = vmatpush1.bf16.msra.mxu0 0
    %2308 = vmatprep.subr.bf16.mxu0 0
    %2309 = vmatpush1.bf16.msra.mxu0 0
    %2310 = vmatprep.subr.bf16.mxu0 0
    %2311 = vmatpush1.bf16.msra.mxu0 0
    %2312 = vmatprep.subr.bf16.mxu0 0
    %2313 = vmatpush1.bf16.msra.mxu0 0
    %2314 = vmatprep.subr.bf16.mxu0 0
    %2315 = vmatpush1.bf16.msra.mxu0 0
    %2316 = vmatprep.mubr.bf16.mxu0 0
    %2317 = vmatmul.mubr.bf16.gmra.mrb[0].mxu0 %v2279
    %v2318 = vpop.f32.mrb[0].mxu0
    %v2319 = vadd.f32 %v2265, %v2318
    %v2320 = vpop.f32.mrb[0].mxu0
    %v2321 = vpop.f32.mrb[0].mxu0
    %v2322 = vadd.f32 %v2265, %v2321
    %v2323 = vpop.f32.mrb[0].mxu0
    %2324 = vmatprep.mubr.bf16.mxu0 0
    %2325 = vmatmul.mubr.bf16.gmra.mrb[0].mxu0 %v2282
    %v2326 = vpop.f32.mrb[0].mxu0
    %v2327 = vadd.f32 %v2265, %v2326
    %v2328 = vpop.f32.mrb[0].mxu0
    %v2329 = vpop.f32.mrb[0].mxu0
    %v2330 = vadd.f32 %v2265, %v2329
    %v2331 = vpop.f32.mrb[0].mxu0
    %2332 = vdwg.mxu0
    %v2333 = vmul.f32 %v2319, 0.5
    %v2334 = vmul.f32 %v2322, 0.5
    %v2335 = vmul.f32 %v2327, 0.5
    %v2336 = vmul.f32 %v2330, 0.5
    %v2337 = vmul.f32 %v2319, 0.70710677
    %v2338 = vmul.f32 %v2322, 0.70710677
    %v2339 = vmul.f32 %v2327, 0.70710677
    %v2340 = vmul.f32 %v2330, 0.70710677
    %v2341 = verf.f32.pop %v2337
    %v2342 = verf.f32.pop %v2338
    %v2343 = verf.f32.pop %v2339
    %v2344 = verf.f32.pop %v2340
    %v2345 = vadd.f32 %v2341, 1.0
    %v2346 = vadd.f32 %v2342, 1.0
    %v2347 = vadd.f32 %v2343, 1.0
    %v2348 = vadd.f32 %v2344, 1.0
    %v2349 = vmul.f32 %v2333, %v2345
    %v2350 = vmul.f32 %v2334, %v2346
    %v2351 = vmul.f32 %v2335, %v2347
    %v2352 = vmul.f32 %v2336, %v2348
    %v2353 = vld [vmem:[%s1 + $0xb8] sm:$0xf]
    %v2354 = vld [vmem:[%s1 + $0xbc] sm:$0xf]
    %v2355 = vld [vmem:[%s1 + $0xc0] sm:$0xf]
    %v2356 = vld [vmem:[%s1 + $0xc4] sm:$0xf]
    %v2357 = vld [vmem:[%s1 + $0xc8] sm:$0xf]
    %v2358 = vld [vmem:[%s1 + $0xcc] sm:$0xf]
    %v2359 = vld [vmem:[%s1 + $0xd0] sm:$0xf]
    %v2360 = vld [vmem:[%s1 + $0xd4] sm:$0xf]
    %v2361 = vld [vmem:[%s1 + $0xd8] sm:$0xf]
    %v2362 = vld [vmem:[%s1 + $0xdc] sm:$0xf]
    %v2363 = vld [vmem:[%s1 + $0xe0] sm:$0xf]
    %v2364 = vld [vmem:[%s1 + $0xe4] sm:$0xf]
    %v2365 = vld [vmem:[%s1 + $0xe8] sm:$0xf]
    %v2366 = vld [vmem:[%s1 + $0xec] sm:$0xf]
    %v2367 = vld [vmem:[%s1 + $0xf0] sm:$0xf]
    %v2368 = vld [vmem:[%s1 + $0xf4] sm:$0xf]
    %v2369 = vpack.c.bf16 %v2350, %v2349
    %v2370 = vpack.c.bf16 %v2352, %v2351
    %v2387 = vunpack.c.l.b16 %v2353
    %v2388 = vunpack.c.l.b16 %v2354
    %v2389 = vunpack.c.l.b16 %v2355
    %v2390 = vunpack.c.l.b16 %v2356
    %v2391 = vunpack.c.l.b16 %v2357
    %v2392 = vunpack.c.l.b16 %v2358
    %v2393 = vunpack.c.l.b16 %v2359
    %v2394 = vunpack.c.l.b16 %v2360
    %v2395 = vunpack.c.l.b16 %v2361
    %v2396 = vunpack.c.l.b16 %v2362
    %v2397 = vunpack.c.l.b16 %v2363
    %v2398 = vunpack.c.l.b16 %v2364
    %v2399 = vunpack.c.l.b16 %v2365
    %v2400 = vunpack.c.l.b16 %v2366
    %v2401 = vunpack.c.l.b16 %v2367
    %v2402 = vunpack.c.l.b16 %v2368
    %v2403 = vpack.c.b16 %v2388, %v2387
    %v2404 = vpack.c.b16 %v2390, %v2389
    %v2405 = vpack.c.b16 %v2392, %v2391
    %v2406 = vpack.c.b16 %v2394, %v2393
    %v2407 = vpack.c.b16 %v2396, %v2395
    %v2408 = vpack.c.b16 %v2398, %v2397
    %v2409 = vpack.c.b16 %v2400, %v2399
    %v2410 = vpack.c.b16 %v2402, %v2401
    %2419 = vmatprep.subr.bf16.mxu0 0
    %2420 = vmatpush1.bf16.msra.mxu0 %v2403
    %2421 = vmatprep.subr.bf16.mxu0 0
    %2422 = vmatpush1.bf16.msra.mxu0 %v2404
    %2423 = vmatprep.subr.bf16.mxu0 0
    %2424 = vmatpush1.bf16.msra.mxu0 %v2405
    %2425 = vmatprep.subr.bf16.mxu0 0
    %2426 = vmatpush1.bf16.msra.mxu0 %v2406
    %2427 = vmatprep.subr.bf16.mxu0 0
    %2428 = vmatpush1.bf16.msra.mxu0 %v2407
    %2429 = vmatprep.subr.bf16.mxu0 0
    %2430 = vmatpush1.bf16.msra.mxu0 %v2408
    %2431 = vmatprep.subr.bf16.mxu0 0
    %2432 = vmatpush1.bf16.msra.mxu0 %v2409
    %2433 = vmatprep.subr.bf16.mxu0 0
    %2434 = vmatpush1.bf16.msra.mxu0 %v2410
    %2435 = vmatprep.subr.bf16.mxu0 0
    %2436 = vmatpush1.bf16.msra.mxu0 0
    %2437 = vmatprep.subr.bf16.mxu0 0
    %2438 = vmatpush1.bf16.msra.mxu0 0
    %2439 = vmatprep.subr.bf16.mxu0 0
    %2440 = vmatpush1.bf16.msra.mxu0 0
    %2441 = vmatprep.subr.bf16.mxu0 0
    %2442 = vmatpush1.bf16.msra.mxu0 0
    %2443 = vmatprep.subr.bf16.mxu0 0
    %2444 = vmatpush1.bf16.msra.mxu0 0
    %2445 = vmatprep.subr.bf16.mxu0 0
    %2446 = vmatpush1.bf16.msra.mxu0 0
    %2447 = vmatprep.subr.bf16.mxu0 0
    %2448 = vmatpush1.bf16.msra.mxu0 0
    %2449 = vmatprep.subr.bf16.mxu0 0
    %2450 = vmatpush1.bf16.msra.mxu0 0
    %2451 = vmatprep.mubr.bf16.mxu0 0
    %2452 = vmatmul.mubr.bf16.gmra.mrb[0].mxu0 %v2369
    %v2453 = vpop.f32.mrb[0].mxu0
    %v2454 = vadd.f32 0.0, %v2453
    %v2455 = vpop.f32.mrb[0].mxu0
    %v2456 = vpop.f32.mrb[0].mxu0
    %v2457 = vadd.f32 0.0, %v2456
    %v2458 = vpop.f32.mrb[0].mxu0
    %2459 = vmatprep.mubr.bf16.mxu0 0
    %2460 = vmatmul.mubr.bf16.gmra.mrb[0].mxu0 %v2370
    %v2461 = vpop.f32.mrb[0].mxu0
    %v2462 = vadd.f32 0.0, %v2461
    %v2463 = vpop.f32.mrb[0].mxu0
    %v2464 = vpop.f32.mrb[0].mxu0
    %v2465 = vadd.f32 0.0, %v2464
    %v2466 = vpop.f32.mrb[0].mxu0
    %2467 = vdwg.mxu0
    %v2468 = vadd.f32 %v2184, %v2454
    %v2469 = vadd.f32 %v2185, %v2457
    %v2470 = vadd.f32 %v2186, %v2462
    %v2471 = vadd.f32 %v2187, %v2465
    %v2472 = vlaneseq
    %v2473 = vshrl.u32 %v2472, 7
    %v2474 = vsub.s32 0, %v2473
    %v2475 = vrot.slane %v18, %v2474
    %v2476 = vadd.f32 %v2468, %v2475
    %v2477 = vadd.f32 %v2469, %v2475
    %v2478 = vadd.f32 %v2470, %v2475
    %v2479 = vadd.f32 %v2471, %v2475
    %v2481 = vsel %vm142, %v51, 0
    %2483 = vmatprep.subr.mxu0 0.0
    %2484 = vmatpush1.msra.mxu0 %v2476
    %2485 = vmatprep.subr.mxu0 0.0
    %2486 = vmatpush1.msra.mxu0 %v2477
    %2487 = vmatprep.subr.mxu0 0.0
    %2488 = vmatpush1.msra.mxu0 %v2478
    %2489 = vmatprep.subr.mxu0 0.0
    %2490 = vmatpush1.msra.mxu0 %v2479
    %2491 = vmatprep.subr.mxu0 0.0
    %2492 = vmatpush1.msra.mxu0 0.0
    %2493 = vmatprep.subr.mxu0 0.0
    %2494 = vmatpush1.msra.mxu0 0.0
    %2495 = vmatprep.subr.mxu0 0.0
    %2496 = vmatpush1.msra.mxu0 0.0
    %2497 = vmatprep.subr.mxu0 0.0
    %2498 = vmatpush1.msra.mxu0 0.0
    %2499 = vmatprep.subr.mxu0 0.0
    %2500 = vmatpush1.msra.mxu0 0.0
    %2501 = vmatprep.subr.mxu0 0.0
    %2502 = vmatpush1.msra.mxu0 0.0
    %2503 = vmatprep.subr.mxu0 0.0
    %2504 = vmatpush1.msra.mxu0 0.0
    %2505 = vmatprep.subr.mxu0 0.0
    %2506 = vmatpush1.msra.mxu0 0.0
    %2507 = vmatprep.subr.mxu0 0.0
    %2508 = vmatpush1.msra.mxu0 0.0
    %2509 = vmatprep.subr.mxu0 0.0
    %2510 = vmatpush1.msra.mxu0 0.0
    %2511 = vmatprep.subr.mxu0 0.0
    %2512 = vmatpush1.msra.mxu0 0.0
    %2513 = vmatprep.subr.mxu0 0.0
    %2514 = vmatpush1.msra.mxu0 0.0
    %2515 = vmatprep.subr.mxu0 0.0
    %2516 = vmatpush1.msra.mxu0 0.0
    %2517 = vmatprep.subr.mxu0 0.0
    %2518 = vmatpush1.msra.mxu0 0.0
    %2519 = vmatprep.subr.mxu0 0.0
    %2520 = vmatpush1.msra.mxu0 0.0
    %2521 = vmatprep.subr.mxu0 0.0
    %2522 = vmatpush1.msra.mxu0 0.0
    %2523 = vmatprep.subr.mxu0 0.0
    %2524 = vmatpush1.msra.mxu0 0.0
    %2525 = vmatprep.subr.mxu0 0.0
    %2526 = vmatpush1.msra.mxu0 0.0
    %2527 = vmatprep.subr.mxu0 0.0
    %2528 = vmatpush1.msra.mxu0 0.0
    %2529 = vmatprep.subr.mxu0 0.0
    %2530 = vmatpush1.msra.mxu0 0.0
    %2531 = vmatprep.subr.mxu0 0.0
    %2532 = vmatpush1.msra.mxu0 0.0
    %2533 = vmatprep.subr.mxu0 0.0
    %2534 = vmatpush1.msra.mxu0 0.0
    %2535 = vmatprep.subr.mxu0 0.0
    %2536 = vmatpush1.msra.mxu0 0.0
    %2537 = vmatprep.subr.mxu0 0.0
    %2538 = vmatpush1.msra.mxu0 0.0
    %2539 = vmatprep.subr.mxu0 0.0
    %2540 = vmatpush1.msra.mxu0 0.0
    %2541 = vmatprep.subr.mxu0 0.0
    %2542 = vmatpush1.msra.mxu0 0.0
    %2543 = vmatprep.subr.mxu0 0.0
    %2544 = vmatpush1.msra.mxu0 0.0
    %2545 = vmatprep.subr.mxu0 0.0
    %2546 = vmatpush1.msra.mxu0 0.0
    %2547 = vmatprep.mubr.f32.mxu0 0.0
    %2548 = vmatmul.mubr.f32.gmra.mrb[0].mxu0 %v2481
    %v2549 = vpop.f32.mrb[0].mxu0
    %v2550 = vadd.f32 0.0, %v2549
    %v2551 = vpop.f32.mrb[0].mxu0
    %2552 = vdwg.mxu0
    %vm2553 = vcmask 254976
    %v2554 = vsel %vm2553, %v2550, 0.0
    %2555 = vadd.xlane.f32.xlu0 %v2554
    %v2556 = vpop.xlane.xlu0 %2555
    %v2557 = vmul.f32 %v2556, %v155
    %v2558 = vsub.f32 %v2550, %v2557
    %v2559 = vmul.f32 %v2558, %v2558
    %v2560 = vsel %vm2553, %v2559, 0.0
    %2561 = vadd.xlane.f32.xlu0 %v2560
    %v2562 = vpop.xlane.xlu0 %2561
    %v2563 = vmul.f32 %v2562, %v155
    %v2564 = vadd.f32 %v2563, 1e-05
    %v2565 = vrsqrt.pop %v2564
    %v2566 = vmul.f32 %v2558, %v2565
    %v2567 = vlaneseq
    %v2568 = vshrl.u32 %v2567, 7
    %v2569 = vsub.s32 1, %v2568
    %v2570 = vrot.slane %v18, %v2569
    %v2571 = vmul.f32 %v2566, %v2570
    %v2572 = vlaneseq
    %v2573 = vshrl.u32 %v2572, 7
    %v2574 = vsub.s32 2, %v2573
    %v2575 = vrot.slane %v18, %v2574
    %v2576 = vadd.f32 %v2571, %v2575
    %v2577 = vld [vmem:[%s1 + $0xf8] sm:$0xf]
    %v2578 = vld [vmem:[%s1 + $0xfc] sm:$0xf]
    %v2579 = vld [vmem:[%s1 + $0x100] sm:$0xf]
    %v2580 = vld [vmem:[%s1 + $0x104] sm:$0xf]
    %v2581 = vpack.c.bf16 %v2576, %v2576
    %v2582 = vlaneseq
    %v2583 = vshrl.u32 %v2582, 7
    %v2584 = vsub.s32 3, %v2583
    %v2585 = vrot.slane %v18, %v2584
    %v2590 = vunpack.c.l.b16 %v2577
    %v2591 = vunpack.c.l.b16 %v2578
    %v2592 = vunpack.c.l.b16 %v2579
    %v2593 = vunpack.c.l.b16 %v2580
    %v2594 = vpack.c.b16 %v2591, %v2590
    %v2595 = vpack.c.b16 %v2593, %v2592
    %v2599 = vsel %vm142, %v2581, 0
    %2601 = vmatprep.subr.bf16.mxu0 0
    %2602 = vmatpush1.bf16.msra.mxu0 %v2594
    %2603 = vmatprep.subr.bf16.mxu0 0
    %2604 = vmatpush1.bf16.msra.mxu0 %v2595
    %2605 = vmatprep.subr.bf16.mxu0 0
    %2606 = vmatpush1.bf16.msra.mxu0 0
    %2607 = vmatprep.subr.bf16.mxu0 0
    %2608 = vmatpush1.bf16.msra.mxu0 0
    %2609 = vmatprep.subr.bf16.mxu0 0
    %2610 = vmatpush1.bf16.msra.mxu0 0
    %2611 = vmatprep.subr.bf16.mxu0 0
    %2612 = vmatpush1.bf16.msra.mxu0 0
    %2613 = vmatprep.subr.bf16.mxu0 0
    %2614 = vmatpush1.bf16.msra.mxu0 0
    %2615 = vmatprep.subr.bf16.mxu0 0
    %2616 = vmatpush1.bf16.msra.mxu0 0
    %2617 = vmatprep.subr.bf16.mxu0 0
    %2618 = vmatpush1.bf16.msra.mxu0 0
    %2619 = vmatprep.subr.bf16.mxu0 0
    %2620 = vmatpush1.bf16.msra.mxu0 0
    %2621 = vmatprep.subr.bf16.mxu0 0
    %2622 = vmatpush1.bf16.msra.mxu0 0
    %2623 = vmatprep.subr.bf16.mxu0 0
    %2624 = vmatpush1.bf16.msra.mxu0 0
    %2625 = vmatprep.subr.bf16.mxu0 0
    %2626 = vmatpush1.bf16.msra.mxu0 0
    %2627 = vmatprep.subr.bf16.mxu0 0
    %2628 = vmatpush1.bf16.msra.mxu0 0
    %2629 = vmatprep.subr.bf16.mxu0 0
    %2630 = vmatpush1.bf16.msra.mxu0 0
    %2631 = vmatprep.subr.bf16.mxu0 0
    %2632 = vmatpush1.bf16.msra.mxu0 0
    %2633 = vmatprep.mubr.bf16.mxu0 0
    %2634 = vmatmul.mubr.bf16.gmra.mrb[0].mxu0 %v2599
    %v2635 = vpop.f32.mrb[0].mxu0
    %v2636 = vadd.f32 %v2585, %v2635
    %v2637 = vpop.f32.mrb[0].mxu0
    %v2638 = vpop.f32.mrb[0].mxu0
    %v2639 = vpop.f32.mrb[0].mxu0
    %2640 = vdwg.mxu0
    %2641 = vst [vmem:[#allocation2] sm:$0x3] %v2636
    // Predicated region
    $region14: #{base_vit_forward.1} parent=1 // pred_check
      _
    $region15: #{base_vit_forward.1} parent=1 // pred_check_branch
      %2643 = sbr.rel (0) target = $region17
    $region16: #{base_vit_forward.1} parent=1 // pred_region
      %s2645 = ssub.s32 32, 32
      %2646 = vsyncadd [#allocation3], %s2645
      %s2648 = sshll.u32 [#allocation2], 4
      %s2649 = int_to_ptr.vmem [resolvable:$true] %s2648
      %2651 = dma.vmem_to_hbm [thread:$0]  %s2649, 32, %s3, [#allocation3]
    $region17: #{base_vit_forward.1} parent=1 // pred_fallthru
      _
    // Predicated region
    $region18: #{base_vit_forward.1} parent=1 // pred_check
      _
    $region19: #{base_vit_forward.1} parent=1 // pred_check_branch
      %2653 = sbr.rel (0) target = $region21
    $region20: #{base_vit_forward.1} parent=1 // pred_region
      %2654 = dma.done [#allocation3], 32
    $region21: #{base_vit_forward.1} parent=1 // pred_fallthru
      _
    %2655 = vsyncpa [#allocation3], 1

</llo_original>
